<compile_context>
chip_gen: v6e
topology: v6e:2x2x1
jax: 0.10.0
libtpu: 0.0.40
codegen_flags: <defaults>
</compile_context>

<pallas_src>
import functools

import jax
import jax.numpy as jnp
from jax import lax
from jax.experimental import pallas as pl
from jax.experimental.pallas import tpu as pltpu


def _round_up(x, m):
    return ((x + m - 1) // m) * m


# ---------------------------------------------------------- shared MLP head ---
def _mlp_head(h_f32, b1_ref, w2_ref, b2_ref, o_ref):
    # dropout1 is identity at inference time.
    # TODO(synk): training-mode dropout (Bernoulli mask via pltpu.prng_*) not emitted.
    h = jnp.tanh(h_f32 + b1_ref[...])                       # f32 elementwise (v5e-safe)
    logits = jnp.dot(h.astype(w2_ref.dtype), w2_ref[...],
                     preferred_element_type=jnp.float32) + b2_ref[...]
    # numerically-stable log_softmax along the last (lane) axis
    m = jnp.max(logits, axis=-1, keepdims=True)
    shifted = logits - m
    lse = jnp.log(jnp.sum(jnp.exp(shifted), axis=-1, keepdims=True))
    # TODO(synk): T=16 output is lane-sparse (16/128 lanes per store); a lane-dense
    # (B//8, 128) output slab would need an in-kernel relayout and was not clearly a win.
    o_ref[...] = shifted - lse


# ----------------------------------------- fused embedding-gather + MLP path ---
def tagger_fused_kernel(win_ref, emb_ref, w1_ref, b1_ref, w2_ref, b2_ref, o_ref):
    """win_ref: (TB, W) int32; emb_ref: (V, D) bf16 resident; weights resident."""
    tb, W = win_ref.shape
    V, D = emb_ref.shape
    H = w1_ref.shape[1]

    win = win_ref[...]                                       # (TB, W) int32
    table = emb_ref[...]                                     # (V, D) bf16
    col_ids = lax.broadcasted_iota(jnp.int32, (tb, V), 1)    # (TB, V)

    # Exact gather via one-hot matmul on the MXU, folded straight into fc1:
    #   x @ W1 == sum_w (onehot_w @ E) @ W1[w*D:(w+1)*D]
    h = jnp.zeros((tb, H), jnp.float32)
    for w in range(W):                                       # W is small & static (5)
        onehot = jnp.where(win[:, w:w + 1] == col_ids, 1.0, 0.0).astype(table.dtype)
        emb_w = jnp.dot(onehot, table, preferred_element_type=jnp.float32)   # (TB, D) exact
        h = h + jnp.dot(emb_w.astype(w1_ref.dtype),
                        w1_ref[w * D:(w + 1) * D, :],
                        preferred_element_type=jnp.float32)
    _mlp_head(h, b1_ref, w2_ref, b2_ref, o_ref)


# ------------------------------------------- pre-gathered activation path ----
def tagger_kernel(x_ref, w1_ref, b1_ref, w2_ref, b2_ref, o_ref):
    """x_ref: (TB, W*D) bf16 (embedding gather done by XLA in the wrapper)."""
    h = jnp.dot(x_ref[...], w1_ref[...], preferred_element_type=jnp.float32)
    _mlp_head(h, b1_ref, w2_ref, b2_ref, o_ref)


# ----------------------------------------------------------------- wrapper ---
@functools.partial(jax.jit, static_argnames=("tile_b", "fuse_embedding"))
def tagger_forward(windows, emb_table, w1, b1, w2, b2, *,
                   tile_b=512, fuse_embedding=None):
    """windows: int (B, WINDOW_SIZE) token ids.  Returns (B, target_size) log-probs."""
    B, W = windows.shape
    V, D = emb_table.shape
    Din = D * W
    H = w1.shape[1]
    T = w2.shape[1]

    if fuse_embedding is None:
        # One-hot MXU gather is only worthwhile when the table is small enough
        # to sit in VMEM and the one-hot matmul is cheap relative to fc1.
        fuse_embedding = V <= 1024

    cdt = jnp.bfloat16
    emb_bf = emb_table.astype(cdt)
    w1_bf = w1.astype(cdt)
    w2_bf = w2.astype(cdt)
    b1r = b1.reshape(1, H).astype(jnp.float32)
    b2r = b2.reshape(1, T).astype(jnp.float32)

    # Effective batch tile: multiple of 8 (sublane), no larger than the batch.
    tb = max(8, _round_up(min(tile_b, B), 8))
    B_pad = _round_up(B, tb)
    grid = (B_pad // tb,)

    windows_p = jnp.pad(windows.astype(jnp.int32), ((0, B_pad - B), (0, 0)))

    # Constant-index-map specs: weights/table are DMA'd once and stay resident.
    w_specs = [
        pl.BlockSpec((Din, H), lambda i: (0, 0)),        # W1 (resident)
        pl.BlockSpec((1, H), lambda i: (0, 0)),          # b1
        pl.BlockSpec((H, T), lambda i: (0, 0)),          # W2 (resident)
        pl.BlockSpec((1, T), lambda i: (0, 0)),          # b2
    ]
    out_spec = pl.BlockSpec((tb, T), lambda i: (i, 0))
    cparams = pltpu.CompilerParams(dimension_semantics=("parallel",))

    if fuse_embedding:
        out = pl.pallas_call(
            tagger_fused_kernel,
            out_shape=jax.ShapeDtypeStruct((B_pad, T), jnp.float32),
            grid_spec=pltpu.PrefetchScalarGridSpec(
                num_scalar_prefetch=0,
                grid=grid,
                in_specs=[
                    pl.BlockSpec((tb, W), lambda i: (i, 0)),   # window ids tile
                    pl.BlockSpec((V, D), lambda i: (0, 0)),    # embedding table (resident)
                    *w_specs,
                ],
                out_specs=out_spec,
            ),
            compiler_params=cparams,
        )(windows_p, emb_bf, w1_bf, b1r, w2_bf, b2r)
    else:
        # Large-vocab fallback: XLA gather in bf16, MLP + log_softmax in the kernel.
        x = jnp.take(emb_bf, windows_p, axis=0).reshape(B_pad, Din)
        out = pl.pallas_call(
            tagger_kernel,
            out_shape=jax.ShapeDtypeStruct((B_pad, T), jnp.float32),
            grid_spec=pltpu.PrefetchScalarGridSpec(
                num_scalar_prefetch=0,
                grid=grid,
                in_specs=[pl.BlockSpec((tb, Din), lambda i: (i, 0)), *w_specs],
                out_specs=out_spec,
            ),
            compiler_params=cparams,
        )(x, w1_bf, b1r, w2_bf, b2r)

    return out[:B]


# ---------------------------------------------------------- parameter init ---
def xavier_uniform(key, shape, gain=1.0, dtype=jnp.float32):
    fan_in, fan_out = shape[0], shape[1]
    limit = gain * jnp.sqrt(6.0 / (fan_in + fan_out))
    return jax.random.uniform(key, shape, dtype=dtype, minval=-limit, maxval=limit)


if __name__ == "__main__":
    # Small model dims consistent with the module; batch sized so the grid has
    # >=2 steps (and a ragged last tile) at tile_b=128.
    VOCAB = 100
    EMBEDDING_DIM = 32
    WINDOW_SIZE = 5
    HIDDEN = 64
    TARGET = 16
    BATCH = 200

    key = jax.random.PRNGKey(0)
    k_emb, k_w1, k_w2, k_win = jax.random.split(key, 4)

    # nn.Embedding(len(vocab), embedding_dim), xavier_uniform
    emb_table = xavier_uniform(k_emb, (VOCAB, EMBEDDING_DIM))
    # nn.Linear(emb_dim*WINDOW, hidden): torch weight is (out, in); we keep (in, out).
    tanh_gain = 5.0 / 3.0  # torch.nn.init.calculate_gain('tanh')
    w1 = xavier_uniform(k_w1, (EMBEDDING_DIM * WINDOW_SIZE, HIDDEN), gain=tanh_gain)
    b1 = jnp.zeros((HIDDEN,), jnp.float32)
    # nn.Linear(hidden, target_size)
    w2 = xavier_uniform(k_w2, (HIDDEN, TARGET))
    b2 = jnp.zeros((TARGET,), jnp.float32)

    windows = jax.random.randint(k_win, (BATCH, WINDOW_SIZE), 0, VOCAB, dtype=jnp.int32)

    # Fused-gather path (vocab small enough for the VMEM-resident table).
    out = tagger_forward(windows, emb_table, w1, b1, w2, b2, tile_b=128)
    out = jax.block_until_ready(out)
    # Fallback path (XLA gather outside the kernel).
    out_nf = tagger_forward(windows, emb_table, w1, b1, w2, b2,
                            tile_b=128, fuse_embedding=False)
    out_nf = jax.block_until_ready(out_nf)

    # Plain-JAX reference mirroring the kernel's bf16-input / f32-accumulate math.
    emb_bf = emb_table.astype(jnp.bfloat16)
    x_ref = jnp.take(emb_bf, windows, axis=0).reshape(BATCH, -1)
    h_ref = jnp.tanh(jnp.dot(x_ref, w1.astype(jnp.bfloat16),
                             preferred_element_type=jnp.float32) + b1)
    logits_ref = jnp.dot(h_ref.astype(jnp.bfloat16), w2.astype(jnp.bfloat16),
                         preferred_element_type=jnp.float32) + b2
    ref = jax.nn.log_softmax(logits_ref, axis=-1)

    assert out.shape == (BATCH, TARGET)
    assert out_nf.shape == (BATCH, TARGET)
    row_sums = jnp.exp(out).sum(axis=-1)
    assert jnp.allclose(row_sums, jnp.ones_like(row_sums), atol=1e-3)
    assert jnp.allclose(out, ref, atol=2e-2, rtol=2e-2)
    assert jnp.allclose(out_nf, ref, atol=2e-2, rtol=2e-2)

    print("KERNEL_OK")
</pallas_src>

<mosaic_0001>
module attributes {stable_mosaic.version = 11 : i64} {
  func.func @tagger_fused_kernel(%arg0: i32, %arg1: memref<128x5xi32, #tpu.memory_space<vmem>>, %arg2: memref<100x32xbf16, #tpu.memory_space<vmem>>, %arg3: memref<160x64xbf16, #tpu.memory_space<vmem>>, %arg4: memref<1x64xf32, #tpu.memory_space<vmem>>, %arg5: memref<64x16xbf16, #tpu.memory_space<vmem>>, %arg6: memref<1x16xf32, #tpu.memory_space<vmem>>, %arg7: memref<128x16xf32, #tpu.memory_space<vmem>>) attributes {dimension_semantics = [#tpu.dimension_semantics<parallel>], iteration_bounds = array<i64: 2>, scalar_prefetch = 0 : i64, scratch_operands = 0 : i64, tpu.core_type = #tpu.core_type<tc>, window_params = [{transform_indices = @transform_0, window_bounds = array<i64: 128, 5>}, {pipeline_mode = #tpu.pipeline_mode<synchronous>, transform_indices = @transform_1, window_bounds = array<i64: 100, 32>}, {pipeline_mode = #tpu.pipeline_mode<synchronous>, transform_indices = @transform_2, window_bounds = array<i64: 160, 64>}, {pipeline_mode = #tpu.pipeline_mode<synchronous>, transform_indices = @transform_3, window_bounds = array<i64: 1, 64>}, {pipeline_mode = #tpu.pipeline_mode<synchronous>, transform_indices = @transform_4, window_bounds = array<i64: 64, 16>}, {pipeline_mode = #tpu.pipeline_mode<synchronous>, transform_indices = @transform_5, window_bounds = array<i64: 1, 16>}, {transform_indices = @transform_6, window_bounds = array<i64: 128, 16>}]} {
    %c0 = arith.constant 0 : index
    %c0_0 = arith.constant 0 : index
    %0 = vector.load %arg1[%c0, %c0_0] : memref<128x5xi32, #tpu.memory_space<vmem>>, vector<128x5xi32>
    %c0_1 = arith.constant 0 : index
    %c0_2 = arith.constant 0 : index
    %1 = vector.load %arg2[%c0_1, %c0_2] : memref<100x32xbf16, #tpu.memory_space<vmem>>, vector<100x32xbf16>
    %2 = tpu.iota {dimensions = array<i32: 1>} : vector<128x100xi32>
    %cst = arith.constant 0.000000e+00 : f32
    %3 = vector.broadcast %cst : f32 to vector<128x64xf32>
    %4 = vector.extract_strided_slice %0 {offsets = [0, 0], sizes = [128, 1], strides = [1, 1]} : vector<128x5xi32> to vector<128x1xi32>
    %5 = vector.broadcast %4 : vector<128x1xi32> to vector<128x100xi32>
    %6 = arith.cmpi eq, %5, %2 : vector<128x100xi32>
    %cst_3 = arith.constant 1.000000e+00 : f32
    %cst_4 = arith.constant 0.000000e+00 : f32
    %7 = vector.broadcast %cst_3 : f32 to vector<128x100xf32>
    %8 = vector.broadcast %cst_4 : f32 to vector<128x100xf32>
    %9 = arith.select %6, %7, %8 : vector<128x100xi1>, vector<128x100xf32>
    %10 = arith.truncf %9 : vector<128x100xf32> to vector<128x100xbf16>
    %cst_5 = arith.constant dense<0.000000e+00> : vector<128x32xf32>
    %11 = tpu.matmul %10, %1, %cst_5 {dimension_numbers = #tpu.dot_dimension_numbers<[1], [0], [0], [1], [0, 0, 1, 1], [], []>} : vector<128x100xbf16>, vector<100x32xbf16>, vector<128x32xf32> -> vector<128x32xf32>
    %12 = arith.truncf %11 : vector<128x32xf32> to vector<128x32xbf16>
    %c0_6 = arith.constant 0 : index
    %c0_7 = arith.constant 0 : index
    %13 = vector.load %arg3[%c0_6, %c0_7] : memref<160x64xbf16, #tpu.memory_space<vmem>>, vector<32x64xbf16>
    %cst_8 = arith.constant dense<0.000000e+00> : vector<128x64xf32>
    %14 = tpu.matmul %12, %13, %cst_8 {dimension_numbers = #tpu.dot_dimension_numbers<[1], [0], [0], [1], [0, 0, 1, 1], [], []>} : vector<128x32xbf16>, vector<32x64xbf16>, vector<128x64xf32> -> vector<128x64xf32>
    %15 = arith.addf %3, %14 : vector<128x64xf32>
    %16 = vector.extract_strided_slice %0 {offsets = [0, 1], sizes = [128, 1], strides = [1, 1]} : vector<128x5xi32> to vector<128x1xi32>
    %17 = vector.broadcast %16 : vector<128x1xi32> to vector<128x100xi32>
    %18 = arith.cmpi eq, %17, %2 : vector<128x100xi32>
    %cst_9 = arith.constant 1.000000e+00 : f32
    %cst_10 = arith.constant 0.000000e+00 : f32
    %19 = vector.broadcast %cst_9 : f32 to vector<128x100xf32>
    %20 = vector.broadcast %cst_10 : f32 to vector<128x100xf32>
    %21 = arith.select %18, %19, %20 : vector<128x100xi1>, vector<128x100xf32>
    %22 = arith.truncf %21 : vector<128x100xf32> to vector<128x100xbf16>
    %cst_11 = arith.constant dense<0.000000e+00> : vector<128x32xf32>
    %23 = tpu.matmul %22, %1, %cst_11 {dimension_numbers = #tpu.dot_dimension_numbers<[1], [0], [0], [1], [0, 0, 1, 1], [], []>} : vector<128x100xbf16>, vector<100x32xbf16>, vector<128x32xf32> -> vector<128x32xf32>
    %24 = arith.truncf %23 : vector<128x32xf32> to vector<128x32xbf16>
    %c32 = arith.constant 32 : index
    %c0_12 = arith.constant 0 : index
    %25 = vector.load %arg3[%c32, %c0_12] : memref<160x64xbf16, #tpu.memory_space<vmem>>, vector<32x64xbf16>
    %cst_13 = arith.constant dense<0.000000e+00> : vector<128x64xf32>
    %26 = tpu.matmul %24, %25, %cst_13 {dimension_numbers = #tpu.dot_dimension_numbers<[1], [0], [0], [1], [0, 0, 1, 1], [], []>} : vector<128x32xbf16>, vector<32x64xbf16>, vector<128x64xf32> -> vector<128x64xf32>
    %27 = arith.addf %15, %26 : vector<128x64xf32>
    %28 = vector.extract_strided_slice %0 {offsets = [0, 2], sizes = [128, 1], strides = [1, 1]} : vector<128x5xi32> to vector<128x1xi32>
    %29 = vector.broadcast %28 : vector<128x1xi32> to vector<128x100xi32>
    %30 = arith.cmpi eq, %29, %2 : vector<128x100xi32>
    %cst_14 = arith.constant 1.000000e+00 : f32
    %cst_15 = arith.constant 0.000000e+00 : f32
    %31 = vector.broadcast %cst_14 : f32 to vector<128x100xf32>
    %32 = vector.broadcast %cst_15 : f32 to vector<128x100xf32>
    %33 = arith.select %30, %31, %32 : vector<128x100xi1>, vector<128x100xf32>
    %34 = arith.truncf %33 : vector<128x100xf32> to vector<128x100xbf16>
    %cst_16 = arith.constant dense<0.000000e+00> : vector<128x32xf32>
    %35 = tpu.matmul %34, %1, %cst_16 {dimension_numbers = #tpu.dot_dimension_numbers<[1], [0], [0], [1], [0, 0, 1, 1], [], []>} : vector<128x100xbf16>, vector<100x32xbf16>, vector<128x32xf32> -> vector<128x32xf32>
    %36 = arith.truncf %35 : vector<128x32xf32> to vector<128x32xbf16>
    %c64 = arith.constant 64 : index
    %c0_17 = arith.constant 0 : index
    %37 = vector.load %arg3[%c64, %c0_17] : memref<160x64xbf16, #tpu.memory_space<vmem>>, vector<32x64xbf16>
    %cst_18 = arith.constant dense<0.000000e+00> : vector<128x64xf32>
    %38 = tpu.matmul %36, %37, %cst_18 {dimension_numbers = #tpu.dot_dimension_numbers<[1], [0], [0], [1], [0, 0, 1, 1], [], []>} : vector<128x32xbf16>, vector<32x64xbf16>, vector<128x64xf32> -> vector<128x64xf32>
    %39 = arith.addf %27, %38 : vector<128x64xf32>
    %40 = vector.extract_strided_slice %0 {offsets = [0, 3], sizes = [128, 1], strides = [1, 1]} : vector<128x5xi32> to vector<128x1xi32>
    %41 = vector.broadcast %40 : vector<128x1xi32> to vector<128x100xi32>
    %42 = arith.cmpi eq, %41, %2 : vector<128x100xi32>
    %cst_19 = arith.constant 1.000000e+00 : f32
    %cst_20 = arith.constant 0.000000e+00 : f32
    %43 = vector.broadcast %cst_19 : f32 to vector<128x100xf32>
    %44 = vector.broadcast %cst_20 : f32 to vector<128x100xf32>
    %45 = arith.select %42, %43, %44 : vector<128x100xi1>, vector<128x100xf32>
    %46 = arith.truncf %45 : vector<128x100xf32> to vector<128x100xbf16>
    %cst_21 = arith.constant dense<0.000000e+00> : vector<128x32xf32>
    %47 = tpu.matmul %46, %1, %cst_21 {dimension_numbers = #tpu.dot_dimension_numbers<[1], [0], [0], [1], [0, 0, 1, 1], [], []>} : vector<128x100xbf16>, vector<100x32xbf16>, vector<128x32xf32> -> vector<128x32xf32>
    %48 = arith.truncf %47 : vector<128x32xf32> to vector<128x32xbf16>
    %c96 = arith.constant 96 : index
    %c0_22 = arith.constant 0 : index
    %49 = vector.load %arg3[%c96, %c0_22] : memref<160x64xbf16, #tpu.memory_space<vmem>>, vector<32x64xbf16>
    %cst_23 = arith.constant dense<0.000000e+00> : vector<128x64xf32>
    %50 = tpu.matmul %48, %49, %cst_23 {dimension_numbers = #tpu.dot_dimension_numbers<[1], [0], [0], [1], [0, 0, 1, 1], [], []>} : vector<128x32xbf16>, vector<32x64xbf16>, vector<128x64xf32> -> vector<128x64xf32>
    %51 = arith.addf %39, %50 : vector<128x64xf32>
    %52 = vector.extract_strided_slice %0 {offsets = [0, 4], sizes = [128, 1], strides = [1, 1]} : vector<128x5xi32> to vector<128x1xi32>
    %53 = vector.broadcast %52 : vector<128x1xi32> to vector<128x100xi32>
    %54 = arith.cmpi eq, %53, %2 : vector<128x100xi32>
    %cst_24 = arith.constant 1.000000e+00 : f32
    %cst_25 = arith.constant 0.000000e+00 : f32
    %55 = vector.broadcast %cst_24 : f32 to vector<128x100xf32>
    %56 = vector.broadcast %cst_25 : f32 to vector<128x100xf32>
    %57 = arith.select %54, %55, %56 : vector<128x100xi1>, vector<128x100xf32>
    %58 = arith.truncf %57 : vector<128x100xf32> to vector<128x100xbf16>
    %cst_26 = arith.constant dense<0.000000e+00> : vector<128x32xf32>
    %59 = tpu.matmul %58, %1, %cst_26 {dimension_numbers = #tpu.dot_dimension_numbers<[1], [0], [0], [1], [0, 0, 1, 1], [], []>} : vector<128x100xbf16>, vector<100x32xbf16>, vector<128x32xf32> -> vector<128x32xf32>
    %60 = arith.truncf %59 : vector<128x32xf32> to vector<128x32xbf16>
    %c128 = arith.constant 128 : index
    %c0_27 = arith.constant 0 : index
    %61 = vector.load %arg3[%c128, %c0_27] : memref<160x64xbf16, #tpu.memory_space<vmem>>, vector<32x64xbf16>
    %cst_28 = arith.constant dense<0.000000e+00> : vector<128x64xf32>
    %62 = tpu.matmul %60, %61, %cst_28 {dimension_numbers = #tpu.dot_dimension_numbers<[1], [0], [0], [1], [0, 0, 1, 1], [], []>} : vector<128x32xbf16>, vector<32x64xbf16>, vector<128x64xf32> -> vector<128x64xf32>
    %63 = arith.addf %51, %62 : vector<128x64xf32>
    %c0_29 = arith.constant 0 : index
    %c0_30 = arith.constant 0 : index
    %64 = vector.load %arg4[%c0_29, %c0_30] : memref<1x64xf32, #tpu.memory_space<vmem>>, vector<1x64xf32>
    %65 = vector.broadcast %64 : vector<1x64xf32> to vector<128x64xf32>
    %66 = arith.addf %63, %65 : vector<128x64xf32>
    %67 = math.tanh %66 : vector<128x64xf32>
    %68 = arith.truncf %67 : vector<128x64xf32> to vector<128x64xbf16>
    %c0_31 = arith.constant 0 : index
    %c0_32 = arith.constant 0 : index
    %69 = vector.load %arg5[%c0_31, %c0_32] : memref<64x16xbf16, #tpu.memory_space<vmem>>, vector<64x16xbf16>
    %cst_33 = arith.constant dense<0.000000e+00> : vector<128x16xf32>
    %70 = tpu.matmul %68, %69, %cst_33 {dimension_numbers = #tpu.dot_dimension_numbers<[1], [0], [0], [1], [0, 0, 1, 1], [], []>} : vector<128x64xbf16>, vector<64x16xbf16>, vector<128x16xf32> -> vector<128x16xf32>
    %c0_34 = arith.constant 0 : index
    %c0_35 = arith.constant 0 : index
    %71 = vector.load %arg6[%c0_34, %c0_35] : memref<1x16xf32, #tpu.memory_space<vmem>>, vector<1x16xf32>
    %72 = vector.broadcast %71 : vector<1x16xf32> to vector<128x16xf32>
    %73 = arith.addf %70, %72 : vector<128x16xf32>
    %cst_36 = arith.constant dense<0xFF800000> : vector<128xf32>
    %74 = vector.multi_reduction <maximumf>, %73, %cst_36 [1] : vector<128x16xf32> to vector<128xf32>
    %75 = vector.shape_cast %74 : vector<128xf32> to vector<128x1xf32>
    %76 = vector.broadcast %75 : vector<128x1xf32> to vector<128x16xf32>
    %77 = arith.subf %73, %76 : vector<128x16xf32>
    %78 = math.exp %77 : vector<128x16xf32>
    %cst_37 = arith.constant dense<0.000000e+00> : vector<128xf32>
    %79 = vector.multi_reduction <add>, %78, %cst_37 [1] : vector<128x16xf32> to vector<128xf32>
    %80 = vector.shape_cast %79 : vector<128xf32> to vector<128x1xf32>
    %81 = math.log %80 : vector<128x1xf32>
    %82 = vector.broadcast %81 : vector<128x1xf32> to vector<128x16xf32>
    %83 = arith.subf %77, %82 : vector<128x16xf32>
    %c0_38 = arith.constant 0 : index
    %c0_39 = arith.constant 0 : index
    %84 = vector.load %arg7[%c0_38, %c0_39] : memref<128x16xf32, #tpu.memory_space<vmem>>, vector<128x16xf32>
    tpu.vector_store %arg7[%c0_38, %c0_39], %83 {strides = array<i32>} : memref<128x16xf32, #tpu.memory_space<vmem>>, vector<128x16xf32>,
    return
  }
  func.func @transform_0(%arg0: i32) -> (i32, i32) {
    %c0_i32 = arith.constant 0 : i32
    %c0_i32_0 = arith.constant 0 : i32
    return %arg0, %c0_i32 : i32, i32
  }
  func.func @transform_1(%arg0: i32) -> (i32, i32) {
    %c0_i32 = arith.constant 0 : i32
    %c0_i32_0 = arith.constant 0 : i32
    %c0_i32_1 = arith.constant 0 : i32
    return %c0_i32, %c0_i32_0 : i32, i32
  }
  func.func @transform_2(%arg0: i32) -> (i32, i32) {
    %c0_i32 = arith.constant 0 : i32
    %c0_i32_0 = arith.constant 0 : i32
    %c0_i32_1 = arith.constant 0 : i32
    return %c0_i32, %c0_i32_0 : i32, i32
  }
  func.func @transform_3(%arg0: i32) -> (i32, i32) {
    %c0_i32 = arith.constant 0 : i32
    %c0_i32_0 = arith.constant 0 : i32
    %c0_i32_1 = arith.constant 0 : i32
    return %c0_i32, %c0_i32_0 : i32, i32
  }
  func.func @transform_4(%arg0: i32) -> (i32, i32) {
    %c0_i32 = arith.constant 0 : i32
    %c0_i32_0 = arith.constant 0 : i32
    %c0_i32_1 = arith.constant 0 : i32
    return %c0_i32, %c0_i32_0 : i32, i32
  }
  func.func @transform_5(%arg0: i32) -> (i32, i32) {
    %c0_i32 = arith.constant 0 : i32
    %c0_i32_0 = arith.constant 0 : i32
    %c0_i32_1 = arith.constant 0 : i32
    return %c0_i32, %c0_i32_0 : i32, i32
  }
  func.func @transform_6(%arg0: i32) -> (i32, i32) {
    %c0_i32 = arith.constant 0 : i32
    %c0_i32_0 = arith.constant 0 : i32
    return %arg0, %c0_i32 : i32, i32
  }
}

</mosaic_0001>

<llo_original>
// kernel: tagger_forward.1
$region0: #{tagger_forward.1}
  #allocation0 [shape = 'u32[]', space=smem, size = 0x4, offset = 0x4, fixed_abs, tag = 'smem constant byte address 0x4 - core index']
  #allocation1 [shape = 'u32[144,128]{1,0:T(1,128)}', space=vmem, size = 0x12000, scoped, tag = 'internal scratch']
  %s0 = inlined_call_operand.vmem [shape: s32[256,5], index: 0, kind: input, shape index: {}]
  %s1 = inlined_call_operand.vmem [shape: bf16[100,32], index: 1, kind: input, shape index: {}]
  %s2 = inlined_call_operand.vmem [shape: bf16[160,64], index: 2, kind: input, shape index: {}]
  %s3 = inlined_call_operand.vmem [shape: f32[1,64], index: 3, kind: input, shape index: {}]
  %s4 = inlined_call_operand.vmem [shape: bf16[64,16], index: 4, kind: input, shape index: {}]
  %s5 = inlined_call_operand.vmem [shape: f32[1,16], index: 5, kind: input, shape index: {}]
  %s6 = inlined_call_operand.vmem [shape: f32[256,16], index: 6, kind: output, shape index: {}]
  %s7 = sld [smem:[#allocation0]]
  $region57: #{tagger_forward.1} parent=0
    _
  %s9 = ssub.s32 1, %s7
  %s10 = scalar_select 0, %s9, %s7
  loop: start=0, step=1, limit=4
  $region2: #{tagger_forward.1} parent=0 // loop_pre_header
    _
  $region3: #{tagger_forward.1} parent=0 // loop_header
    %s12 = sphi 0, %s16
    %p13 = scmp.ge.s32.totalorder %s12, 4
    %s22 = sphi 0, %s24
    %s25 = sphi 0, %s22
    %s26 = sphi 0, %s25
    %s42 = sphi 0, %s26
    %s46 = sphi 0, %s46
    %s48 = sphi 0, %s46
    %s49 = sphi 0, %s48
    %s63 = sphi 0, %s49
    %s67 = sphi 0, %s67
    %s69 = sphi 0, %s67
    %s70 = sphi 0, %s69
    %s84 = sphi 0, %s70
    %s88 = sphi 0, %s88
    %s90 = sphi 0, %s88
    %s91 = sphi 0, %s90
    %s105 = sphi 0, %s91
    %s109 = sphi 0, %s109
    %s111 = sphi 0, %s109
    %s112 = sphi 0, %s111
    %s126 = sphi 0, %s112
    %s130 = sphi 0, %s130
    %s132 = sphi 0, %s130
    %s133 = sphi 0, %s132
    %s147 = sphi 0, %s133
    %s153 = sphi 0, %s155
    %s156 = sphi 0, %s153
    %s157 = sphi 0, %s156
    %s173 = sphi 0, %s157
  $region4: #{tagger_forward.1} parent=0 // loop_header_branch
    %15 = sbr.rel (%p13) target = $region8
  $region5: #{tagger_forward.1} parent=0 // loop_body
    %s17 = ssub.s32 %s12, 1
    %s18 = ssub.s32 %s12, 2
    %s19 = sadd.s32 %s12, 1
    %s20 = ssub.s32 %s12, %s19
    %p21 = scmp.eq.s32.totalorder %s20, 0
    %s23 = sadd.s32 %s22, 1
    %s24 = scalar_select %p21, %s22, %s23
    %p27 = pneg %p21
    %p28 = scmp.eq.s32.totalorder %s12, 1
    %p29 = por %p27, %p28
    %p30 = scmp.ne.s32.totalorder %s22, %s25
    %p31 = scmp.eq.s32.totalorder %s12, 0
    %p32 = por %p30, %p31
    %p33 = scmp.ne.s32.totalorder %s22, %s25
    %p34 = scmp.eq.s32.totalorder %s17, 1
    %p35 = por %p33, %p34
    %p36 = scmp.ne.s32.totalorder %s25, %s26
    %p37 = scmp.eq.s32.totalorder %s17, 0
    %p38 = por %p36, %p37
    %p39 = scmp.ne.s32.totalorder %s25, %s26
    %p40 = scmp.eq.s32.totalorder %s18, 1
    %p41 = por %p39, %p40
    %p43 = scmp.ne.s32.totalorder %s26, %s42
    %p44 = scmp.eq.s32.totalorder %s18, 0
    %p45 = por %p43, %p44
    %s47 = sadd.s32 %s46, 1
    %p50 = scmp.eq.s32.totalorder %s12, 1
    %p51 = scmp.ne.s32.totalorder %s46, %s48
    %p52 = scmp.eq.s32.totalorder %s12, 0
    %p53 = por %p51, %p52
    %p54 = scmp.ne.s32.totalorder %s46, %s48
    %p55 = scmp.eq.s32.totalorder %s17, 1
    %p56 = por %p54, %p55
    %p57 = scmp.ne.s32.totalorder %s48, %s49
    %p58 = scmp.eq.s32.totalorder %s17, 0
    %p59 = por %p57, %p58
    %p60 = scmp.ne.s32.totalorder %s48, %s49
    %p61 = scmp.eq.s32.totalorder %s18, 1
    %p62 = por %p60, %p61
    %p64 = scmp.ne.s32.totalorder %s49, %s63
    %p65 = scmp.eq.s32.totalorder %s18, 0
    %p66 = por %p64, %p65
    %s68 = sadd.s32 %s67, 1
    %p71 = scmp.eq.s32.totalorder %s12, 1
    %p72 = scmp.ne.s32.totalorder %s67, %s69
    %p73 = scmp.eq.s32.totalorder %s12, 0
    %p74 = por %p72, %p73
    %p75 = scmp.ne.s32.totalorder %s67, %s69
    %p76 = scmp.eq.s32.totalorder %s17, 1
    %p77 = por %p75, %p76
    %p78 = scmp.ne.s32.totalorder %s69, %s70
    %p79 = scmp.eq.s32.totalorder %s17, 0
    %p80 = por %p78, %p79
    %p81 = scmp.ne.s32.totalorder %s69, %s70
    %p82 = scmp.eq.s32.totalorder %s18, 1
    %p83 = por %p81, %p82
    %p85 = scmp.ne.s32.totalorder %s70, %s84
    %p86 = scmp.eq.s32.totalorder %s18, 0
    %p87 = por %p85, %p86
    %s89 = sadd.s32 %s88, 1
    %p92 = scmp.eq.s32.totalorder %s12, 1
    %p93 = scmp.ne.s32.totalorder %s88, %s90
    %p94 = scmp.eq.s32.totalorder %s12, 0
    %p95 = por %p93, %p94
    %p96 = scmp.ne.s32.totalorder %s88, %s90
    %p97 = scmp.eq.s32.totalorder %s17, 1
    %p98 = por %p96, %p97
    %p99 = scmp.ne.s32.totalorder %s90, %s91
    %p100 = scmp.eq.s32.totalorder %s17, 0
    %p101 = por %p99, %p100
    %p102 = scmp.ne.s32.totalorder %s90, %s91
    %p103 = scmp.eq.s32.totalorder %s18, 1
    %p104 = por %p102, %p103
    %p106 = scmp.ne.s32.totalorder %s91, %s105
    %p107 = scmp.eq.s32.totalorder %s18, 0
    %p108 = por %p106, %p107
    %s110 = sadd.s32 %s109, 1
    %p113 = scmp.eq.s32.totalorder %s12, 1
    %p114 = scmp.ne.s32.totalorder %s109, %s111
    %p115 = scmp.eq.s32.totalorder %s12, 0
    %p116 = por %p114, %p115
    %p117 = scmp.ne.s32.totalorder %s109, %s111
    %p118 = scmp.eq.s32.totalorder %s17, 1
    %p119 = por %p117, %p118
    %p120 = scmp.ne.s32.totalorder %s111, %s112
    %p121 = scmp.eq.s32.totalorder %s17, 0
    %p122 = por %p120, %p121
    %p123 = scmp.ne.s32.totalorder %s111, %s112
    %p124 = scmp.eq.s32.totalorder %s18, 1
    %p125 = por %p123, %p124
    %p127 = scmp.ne.s32.totalorder %s112, %s126
    %p128 = scmp.eq.s32.totalorder %s18, 0
    %p129 = por %p127, %p128
    %s131 = sadd.s32 %s130, 1
    %p134 = scmp.eq.s32.totalorder %s12, 1
    %p135 = scmp.ne.s32.totalorder %s130, %s132
    %p136 = scmp.eq.s32.totalorder %s12, 0
    %p137 = por %p135, %p136
    %p138 = scmp.ne.s32.totalorder %s130, %s132
    %p139 = scmp.eq.s32.totalorder %s17, 1
    %p140 = por %p138, %p139
    %p141 = scmp.ne.s32.totalorder %s132, %s133
    %p142 = scmp.eq.s32.totalorder %s17, 0
    %p143 = por %p141, %p142
    %p144 = scmp.ne.s32.totalorder %s132, %s133
    %p145 = scmp.eq.s32.totalorder %s18, 1
    %p146 = por %p144, %p145
    %p148 = scmp.ne.s32.totalorder %s133, %s147
    %p149 = scmp.eq.s32.totalorder %s18, 0
    %p150 = por %p148, %p149
    %s151 = ssub.s32 %s12, %s19
    %p152 = scmp.eq.s32.totalorder %s151, 0
    %s154 = sadd.s32 %s153, 1
    %s155 = scalar_select %p152, %s153, %s154
    %p158 = pneg %p152
    %p159 = scmp.eq.s32.totalorder %s12, 1
    %p160 = por %p158, %p159
    %p161 = scmp.ne.s32.totalorder %s153, %s156
    %p162 = scmp.eq.s32.totalorder %s12, 0
    %p163 = por %p161, %p162
    %p164 = scmp.ne.s32.totalorder %s153, %s156
    %p165 = scmp.eq.s32.totalorder %s17, 1
    %p166 = por %p164, %p165
    %p167 = scmp.ne.s32.totalorder %s156, %s157
    %p168 = scmp.eq.s32.totalorder %s17, 0
    %p169 = por %p167, %p168
    %p170 = scmp.ne.s32.totalorder %s156, %s157
    %p171 = scmp.eq.s32.totalorder %s18, 1
    %p172 = por %p170, %p171
    %p174 = scmp.ne.s32.totalorder %s157, %s173
    %p175 = scmp.eq.s32.totalorder %s18, 0
    %p176 = por %p174, %p175
    %p177 = scmp.le.s32.totalorder 1, %s12
    %p178 = scmp.lt.s32.totalorder %s12, 3
    %p179 = pnand %p177, %p178
    %p180 = pneg %p179
    // Predicated region
    $region9: #{tagger_forward.1} parent=5 // pred_check
      _
    $region10: #{tagger_forward.1} parent=5 // pred_check_branch
      %182 = sbr.rel (%p179) target = $region12
    $region11: #{tagger_forward.1} parent=5 // pred_region
      %s183 = ssub.s32 %s12, 1
      // Predicated region
      $region13: #{tagger_forward.1} parent=11 // pred_check
        %p184 = pneg %p59
      $region14: #{tagger_forward.1} parent=11 // pred_check_branch
        %186 = sbr.rel (%p184) target = $region16
      $region15: #{tagger_forward.1} parent=11 // pred_region
        _
      $region16: #{tagger_forward.1} parent=11 // pred_fallthru
        _
      // Predicated region
      $region17: #{tagger_forward.1} parent=11 // pred_check
        %p187 = pneg %p80
      $region18: #{tagger_forward.1} parent=11 // pred_check_branch
        %189 = sbr.rel (%p187) target = $region20
      $region19: #{tagger_forward.1} parent=11 // pred_region
        _
      $region20: #{tagger_forward.1} parent=11 // pred_fallthru
        _
      // Predicated region
      $region21: #{tagger_forward.1} parent=11 // pred_check
        %p190 = pneg %p101
      $region22: #{tagger_forward.1} parent=11 // pred_check_branch
        %192 = sbr.rel (%p190) target = $region24
      $region23: #{tagger_forward.1} parent=11 // pred_region
        _
      $region24: #{tagger_forward.1} parent=11 // pred_fallthru
        _
      // Predicated region
      $region25: #{tagger_forward.1} parent=11 // pred_check
        %p193 = pneg %p122
      $region26: #{tagger_forward.1} parent=11 // pred_check_branch
        %195 = sbr.rel (%p193) target = $region28
      $region27: #{tagger_forward.1} parent=11 // pred_region
        _
      $region28: #{tagger_forward.1} parent=11 // pred_fallthru
        _
      // Predicated region
      $region29: #{tagger_forward.1} parent=11 // pred_check
        %p196 = pneg %p143
      $region30: #{tagger_forward.1} parent=11 // pred_check_branch
        %198 = sbr.rel (%p196) target = $region32
      $region31: #{tagger_forward.1} parent=11 // pred_region
        _
      $region32: #{tagger_forward.1} parent=11 // pred_fallthru
        _
    $region12: #{tagger_forward.1} parent=5 // pred_fallthru
      _
    %p199 = scmp.lt.s32.totalorder %s12, 2
    // Predicated region
    $region33: #{tagger_forward.1} parent=5 // pred_check
      %p200 = pneg %p199
    $region34: #{tagger_forward.1} parent=5 // pred_check_branch
      %202 = sbr.rel (%p200) target = $region36
    $region35: #{tagger_forward.1} parent=5 // pred_region
      // Predicated region
      $region37: #{tagger_forward.1} parent=35 // pred_check
        %p203 = pneg %p32
      $region38: #{tagger_forward.1} parent=35 // pred_check_branch
        %205 = sbr.rel (%p203) target = $region40
      $region39: #{tagger_forward.1} parent=35 // pred_region
        %s206 = smul.u32 16, %s12
        %p207 = scmp.lt.s32.totalorder %s206, 31
        %s208 = scalar_select %p207, %s206, 31
        %s209 = smul.addr %s208, 8
        %s210 = scalar_lea.vmem %s0, %s209
        %s211 = smul.u32 16, %s12
      $region40: #{tagger_forward.1} parent=35 // pred_fallthru
        _
    $region36: #{tagger_forward.1} parent=5 // pred_fallthru
      _
    %p212 = scmp.le.s32.totalorder 1, %s12
    %p213 = scmp.lt.s32.totalorder %s12, 3
    %p214 = pnand %p212, %p213
    %p215 = pneg %p214
    // Predicated region
    $region41: #{tagger_forward.1} parent=5 // pred_check
      _
    $region42: #{tagger_forward.1} parent=5 // pred_check_branch
      %217 = sbr.rel (%p214) target = $region44
    $region43: #{tagger_forward.1} parent=5 // pred_region
      %s218 = ssub.s32 %s12, 1
      %s219 = smul.u32 16, %s17
      %p220 = scmp.lt.s32.totalorder %s219, 31
      %s221 = scalar_select %p220, %s219, 31
      %s222 = smul.addr %s221, 8
      %s223 = scalar_lea.vmem %s0, %s222
      %p224 = pneg %p38
      %p225 = pneg %p35
      %p226 = pneg %p59
      %p227 = pneg %p56
      %p228 = pneg %p80
      %p229 = pneg %p77
      %p230 = pneg %p101
      %p231 = pneg %p98
      %p232 = pneg %p122
      %p233 = pneg %p119
      %p234 = pneg %p143
      %p235 = pneg %p140
      %p236 = pneg %p169
      %p237 = pneg %p166
      %s238 = smul.u32 16, %s17
      %p239 = scmp.lt.s32.totalorder %s238, 31
      %s240 = scalar_select %p239, %s238, 31
      %s241 = smul.addr %s240, 8
      %s242 = scalar_lea.vmem %s6, %s241
      %s243 = smul.u32 16, %s17
      %p244 = scmp.lt.s32.totalorder %s243, 31
      %s245 = scalar_select %p244, %s243, 31
      %s246 = smul.addr %s245, 8
      %s247 = scalar_lea.vmem %s0, %s246
      %s248 = smul.u32 16, %s17
      %s249 = smul.u32 16, %s17
      %p250 = scmp.lt.s32.totalorder %s249, 31
      %s251 = scalar_select %p250, %s249, 31
      %s252 = smul.addr %s251, 8
      %s253 = scalar_lea.vmem %s6, %s252
      %s254 = smul.u32 16, %s17
      %v256 = vld [vmem:[%s247] sm:$0xff]
      %v257 = vld [vmem:[%s247 + $0x8] sm:$0xff]
      %v258 = vld [vmem:[%s247 + $0x10] sm:$0xff]
      %v259 = vld [vmem:[%s247 + $0x18] sm:$0xff]
      %v260 = vld [vmem:[%s247 + $0x20] sm:$0xff]
      %v261 = vld [vmem:[%s247 + $0x28] sm:$0xff]
      %v262 = vld [vmem:[%s247 + $0x30] sm:$0xff]
      %v263 = vld [vmem:[%s247 + $0x38] sm:$0xff]
      %v264 = vld [vmem:[%s247 + $0x40] sm:$0xff]
      %v265 = vld [vmem:[%s247 + $0x48] sm:$0xff]
      %v266 = vld [vmem:[%s247 + $0x50] sm:$0xff]
      %v267 = vld [vmem:[%s247 + $0x58] sm:$0xff]
      %v268 = vld [vmem:[%s247 + $0x60] sm:$0xff]
      %v269 = vld [vmem:[%s247 + $0x68] sm:$0xff]
      %v270 = vld [vmem:[%s247 + $0x70] sm:$0xff]
      %v271 = vld [vmem:[%s247 + $0x78] sm:$0xff]
      %v272 = vld [vmem:[%s1] sm:$0xf]
      %v273 = vld [vmem:[%s1 + $0x4] sm:$0xf]
      %v274 = vld [vmem:[%s1 + $0x8] sm:$0xf]
      %v275 = vld [vmem:[%s1 + $0xc] sm:$0xf]
      %v276 = vld [vmem:[%s1 + $0x10] sm:$0xf]
      %v277 = vld [vmem:[%s1 + $0x14] sm:$0xf]
      %v278 = vld [vmem:[%s1 + $0x18] sm:$0xf]
      %v279 = vld [vmem:[%s1 + $0x1c] sm:$0xf]
      %v280 = vld [vmem:[%s1 + $0x20] sm:$0xf]
      %v281 = vld [vmem:[%s1 + $0x24] sm:$0xf]
      %v282 = vld [vmem:[%s1 + $0x28] sm:$0xf]
      %v283 = vld [vmem:[%s1 + $0x2c] sm:$0xf]
      %v284 = vld [vmem:[%s1 + $0x30] sm:$0x3]
      %v285 = vlaneseq
      %v286 = vand.u32 %v285, 127
      %287 = vset.pattern.permute.xlu0 0
      %288 = vperm.xlu0 %287, %v256
      %v289 = vpop.permute.xlu0 %288
      %290 = vset.pattern.permute.xlu0 0
      %291 = vperm.xlu0 %290, %v257
      %v292 = vpop.permute.xlu0 %291
      %293 = vset.pattern.permute.xlu0 0
      %294 = vperm.xlu0 %293, %v258
      %v295 = vpop.permute.xlu0 %294
      %296 = vset.pattern.permute.xlu0 0
      %297 = vperm.xlu0 %296, %v259
      %v298 = vpop.permute.xlu0 %297
      %299 = vset.pattern.permute.xlu0 0
      %300 = vperm.xlu0 %299, %v260
      %v301 = vpop.permute.xlu0 %300
      %302 = vset.pattern.permute.xlu0 0
      %303 = vperm.xlu0 %302, %v261
      %v304 = vpop.permute.xlu0 %303
      %305 = vset.pattern.permute.xlu0 0
      %306 = vperm.xlu0 %305, %v262
      %v307 = vpop.permute.xlu0 %306
      %308 = vset.pattern.permute.xlu0 0
      %309 = vperm.xlu0 %308, %v263
      %v310 = vpop.permute.xlu0 %309
      %311 = vset.pattern.permute.xlu0 0
      %312 = vperm.xlu0 %311, %v264
      %v313 = vpop.permute.xlu0 %312
      %314 = vset.pattern.permute.xlu0 0
      %315 = vperm.xlu0 %314, %v265
      %v316 = vpop.permute.xlu0 %315
      %317 = vset.pattern.permute.xlu0 0
      %318 = vperm.xlu0 %317, %v266
      %v319 = vpop.permute.xlu0 %318
      %320 = vset.pattern.permute.xlu0 0
      %321 = vperm.xlu0 %320, %v267
      %v322 = vpop.permute.xlu0 %321
      %323 = vset.pattern.permute.xlu0 0
      %324 = vperm.xlu0 %323, %v268
      %v325 = vpop.permute.xlu0 %324
      %326 = vset.pattern.permute.xlu0 0
      %327 = vperm.xlu0 %326, %v269
      %v328 = vpop.permute.xlu0 %327
      %329 = vset.pattern.permute.xlu0 0
      %330 = vperm.xlu0 %329, %v270
      %v331 = vpop.permute.xlu0 %330
      %332 = vset.pattern.permute.xlu0 0
      %333 = vperm.xlu0 %332, %v271
      %v334 = vpop.permute.xlu0 %333
      %vm335 = vcmp.eq.s32.totalorder %v289, %v286
      %vm336 = vcmp.eq.s32.totalorder %v292, %v286
      %vm337 = vcmp.eq.s32.totalorder %v295, %v286
      %vm338 = vcmp.eq.s32.totalorder %v298, %v286
      %vm339 = vcmp.eq.s32.totalorder %v301, %v286
      %vm340 = vcmp.eq.s32.totalorder %v304, %v286
      %vm341 = vcmp.eq.s32.totalorder %v307, %v286
      %vm342 = vcmp.eq.s32.totalorder %v310, %v286
      %vm343 = vcmp.eq.s32.totalorder %v313, %v286
      %vm344 = vcmp.eq.s32.totalorder %v316, %v286
      %vm345 = vcmp.eq.s32.totalorder %v319, %v286
      %vm346 = vcmp.eq.s32.totalorder %v322, %v286
      %vm347 = vcmp.eq.s32.totalorder %v325, %v286
      %vm348 = vcmp.eq.s32.totalorder %v328, %v286
      %vm349 = vcmp.eq.s32.totalorder %v331, %v286
      %vm350 = vcmp.eq.s32.totalorder %v334, %v286
      %v351 = vsel %vm335, 1.0, 0.0
      %v352 = vsel %vm336, 1.0, 0.0
      %v353 = vsel %vm337, 1.0, 0.0
      %v354 = vsel %vm338, 1.0, 0.0
      %v355 = vsel %vm339, 1.0, 0.0
      %v356 = vsel %vm340, 1.0, 0.0
      %v357 = vsel %vm341, 1.0, 0.0
      %v358 = vsel %vm342, 1.0, 0.0
      %v359 = vsel %vm343, 1.0, 0.0
      %v360 = vsel %vm344, 1.0, 0.0
      %v361 = vsel %vm345, 1.0, 0.0
      %v362 = vsel %vm346, 1.0, 0.0
      %v363 = vsel %vm347, 1.0, 0.0
      %v364 = vsel %vm348, 1.0, 0.0
      %v365 = vsel %vm349, 1.0, 0.0
      %v366 = vsel %vm350, 1.0, 0.0
      %v367 = vpack.c.bf16 %v352, %v351
      %v368 = vpack.c.bf16 %v354, %v353
      %v369 = vpack.c.bf16 %v356, %v355
      %v370 = vpack.c.bf16 %v358, %v357
      %v371 = vpack.c.bf16 %v360, %v359
      %v372 = vpack.c.bf16 %v362, %v361
      %v373 = vpack.c.bf16 %v364, %v363
      %v374 = vpack.c.bf16 %v366, %v365
      %v388 = vunpack.c.l.b16 %v272
      %v389 = vunpack.c.l.b16 %v273
      %v390 = vunpack.c.l.b16 %v274
      %v391 = vunpack.c.l.b16 %v275
      %v392 = vunpack.c.l.b16 %v276
      %v393 = vunpack.c.l.b16 %v277
      %v394 = vunpack.c.l.b16 %v278
      %v395 = vunpack.c.l.b16 %v279
      %v396 = vunpack.c.l.b16 %v280
      %v397 = vunpack.c.l.b16 %v281
      %v398 = vunpack.c.l.b16 %v282
      %v399 = vunpack.c.l.b16 %v283
      %v400 = vunpack.c.l.b16 %v284
      %v401 = vpack.c.b16 %v389, %v388
      %v402 = vpack.c.b16 %v391, %v390
      %v403 = vpack.c.b16 %v393, %v392
      %v404 = vpack.c.b16 %v395, %v394
      %v405 = vpack.c.b16 %v397, %v396
      %v406 = vpack.c.b16 %v399, %v398
      %v407 = vpack.c.b16 %v400, %v400
      %vm414 = vcmask 818176
      %v416 = vsel %vm414, %v367, 0
      %v419 = vsel %vm414, %v368, 0
      %v422 = vsel %vm414, %v369, 0
      %v425 = vsel %vm414, %v370, 0
      %v428 = vsel %vm414, %v371, 0
      %v431 = vsel %vm414, %v372, 0
      %v434 = vsel %vm414, %v373, 0
      %v437 = vsel %vm414, %v374, 0
      %vm439 = vcmask 1041408
      %v441 = vsel %vm439, %v407, 0
      %443 = vmatprep.subr.bf16.mxu0 0
      %444 = vmatpush1.bf16.msra.mxu0 0
      %445 = vmatprep.subr.bf16.mxu0 0
      %446 = vmatpush1.bf16.msra.mxu0 %v441
      %447 = vmatprep.subr.bf16.mxu0 0
      %448 = vmatpush1.bf16.msra.mxu0 %v406
      %449 = vmatprep.subr.bf16.mxu0 0
      %450 = vmatpush1.bf16.msra.mxu0 %v405
      %451 = vmatprep.subr.bf16.mxu0 0
      %452 = vmatpush1.bf16.msra.mxu0 %v404
      %453 = vmatprep.subr.bf16.mxu0 0
      %454 = vmatpush1.bf16.msra.mxu0 %v403
      %455 = vmatprep.subr.bf16.mxu0 0
      %456 = vmatpush1.bf16.msra.mxu0 %v402
      %457 = vmatprep.subr.bf16.mxu0 0
      %458 = vmatpush1.bf16.msra.mxu0 %v401
      %459 = vmatprep.subr.bf16.mxu0 0
      %460 = vmatpush2.bf16.msra.mxu0 0
      %461 = vmatprep.subr.bf16.mxu0 0
      %462 = vmatpush2.bf16.msra.mxu0 0
      %463 = vmatprep.subr.bf16.mxu0 0
      %464 = vmatpush2.bf16.msra.mxu0 0
      %465 = vmatprep.subr.bf16.mxu0 0
      %466 = vmatpush2.bf16.msra.mxu0 0
      %467 = vmatprep.subr.bf16.mxu0 0
      %468 = vmatpush2.bf16.msra.mxu0 0
      %469 = vmatprep.subr.bf16.mxu0 0
      %470 = vmatpush2.bf16.msra.mxu0 0
      %471 = vmatprep.subr.bf16.mxu0 0
      %472 = vmatpush2.bf16.msra.mxu0 0
      %473 = vmatprep.subr.bf16.mxu0 0
      %474 = vmatpush2.bf16.msra.mxu0 0
      %475 = vmatprep.mubr.bf16.mxu0 0
      %476 = vmatmul.mubr.bf16.gmra.mxu0 %v416
      %v477 = vpop.f32.mrf.mxu0
      %v478 = vadd.f32 0.0, %v477
      %v479 = vpop.f32.mrf.mxu0
      %v480 = vpop.f32.mrf.mxu0
      %v481 = vadd.f32 0.0, %v480
      %v482 = vpop.f32.mrf.mxu0
      %483 = vmatprep.mubr.bf16.mxu0 0
      %484 = vmatmul.mubr.bf16.gmra.mxu0 %v419
      %v485 = vpop.f32.mrf.mxu0
      %v486 = vadd.f32 0.0, %v485
      %v487 = vpop.f32.mrf.mxu0
      %v488 = vpop.f32.mrf.mxu0
      %v489 = vadd.f32 0.0, %v488
      %v490 = vpop.f32.mrf.mxu0
      %491 = vmatprep.mubr.bf16.mxu0 0
      %492 = vmatmul.mubr.bf16.gmra.mxu0 %v422
      %v493 = vpop.f32.mrf.mxu0
      %v494 = vadd.f32 0.0, %v493
      %v495 = vpop.f32.mrf.mxu0
      %v496 = vpop.f32.mrf.mxu0
      %v497 = vadd.f32 0.0, %v496
      %v498 = vpop.f32.mrf.mxu0
      %499 = vmatprep.mubr.bf16.mxu0 0
      %500 = vmatmul.mubr.bf16.gmra.mxu0 %v425
      %v501 = vpop.f32.mrf.mxu0
      %v502 = vadd.f32 0.0, %v501
      %v503 = vpop.f32.mrf.mxu0
      %v504 = vpop.f32.mrf.mxu0
      %v505 = vadd.f32 0.0, %v504
      %v506 = vpop.f32.mrf.mxu0
      %507 = vmatprep.mubr.bf16.mxu0 0
      %508 = vmatmul.mubr.bf16.gmra.mxu0 %v428
      %v509 = vpop.f32.mrf.mxu0
      %v510 = vadd.f32 0.0, %v509
      %v511 = vpop.f32.mrf.mxu0
      %v512 = vpop.f32.mrf.mxu0
      %v513 = vadd.f32 0.0, %v512
      %v514 = vpop.f32.mrf.mxu0
      %515 = vmatprep.mubr.bf16.mxu0 0
      %516 = vmatmul.mubr.bf16.gmra.mxu0 %v431
      %v517 = vpop.f32.mrf.mxu0
      %v518 = vadd.f32 0.0, %v517
      %v519 = vpop.f32.mrf.mxu0
      %v520 = vpop.f32.mrf.mxu0
      %v521 = vadd.f32 0.0, %v520
      %v522 = vpop.f32.mrf.mxu0
      %523 = vmatprep.mubr.bf16.mxu0 0
      %524 = vmatmul.mubr.bf16.gmra.mxu0 %v434
      %v525 = vpop.f32.mrf.mxu0
      %v526 = vadd.f32 0.0, %v525
      %v527 = vpop.f32.mrf.mxu0
      %v528 = vpop.f32.mrf.mxu0
      %v529 = vadd.f32 0.0, %v528
      %v530 = vpop.f32.mrf.mxu0
      %531 = vmatprep.mubr.bf16.mxu0 0
      %532 = vmatmul.mubr.bf16.gmra.mxu0 %v437
      %v533 = vpop.f32.mrf.mxu0
      %v534 = vadd.f32 0.0, %v533
      %v535 = vpop.f32.mrf.mxu0
      %v536 = vpop.f32.mrf.mxu0
      %v537 = vadd.f32 0.0, %v536
      %v538 = vpop.f32.mrf.mxu0
      %539 = vdwg.mxu0
      %v540 = vpack.c.bf16 %v481, %v478
      %v541 = vpack.c.bf16 %v489, %v486
      %v542 = vpack.c.bf16 %v497, %v494
      %v543 = vpack.c.bf16 %v505, %v502
      %v544 = vpack.c.bf16 %v513, %v510
      %v545 = vpack.c.bf16 %v521, %v518
      %v546 = vpack.c.bf16 %v529, %v526
      %v547 = vpack.c.bf16 %v537, %v534
      %v548 = vld [vmem:[%s2] sm:$0xf]
      %v549 = vld [vmem:[%s2 + $0x4] sm:$0xf]
      %v550 = vld [vmem:[%s2 + $0x8] sm:$0xf]
      %v551 = vld [vmem:[%s2 + $0xc] sm:$0xf]
      %552 = vset.pattern.permute.xlu0 1
      %553 = vperm.xlu0 %552, %v256
      %v554 = vpop.permute.xlu0 %553
      %555 = vset.pattern.permute.xlu0 1
      %556 = vperm.xlu0 %555, %v257
      %v557 = vpop.permute.xlu0 %556
      %558 = vset.pattern.permute.xlu0 1
      %559 = vperm.xlu0 %558, %v258
      %v560 = vpop.permute.xlu0 %559
      %561 = vset.pattern.permute.xlu0 1
      %562 = vperm.xlu0 %561, %v259
      %v563 = vpop.permute.xlu0 %562
      %564 = vset.pattern.permute.xlu0 1
      %565 = vperm.xlu0 %564, %v260
      %v566 = vpop.permute.xlu0 %565
      %567 = vset.pattern.permute.xlu0 1
      %568 = vperm.xlu0 %567, %v261
      %v569 = vpop.permute.xlu0 %568
      %570 = vset.pattern.permute.xlu0 1
      %571 = vperm.xlu0 %570, %v262
      %v572 = vpop.permute.xlu0 %571
      %573 = vset.pattern.permute.xlu0 1
      %574 = vperm.xlu0 %573, %v263
      %v575 = vpop.permute.xlu0 %574
      %576 = vset.pattern.permute.xlu0 1
      %577 = vperm.xlu0 %576, %v264
      %v578 = vpop.permute.xlu0 %577
      %579 = vset.pattern.permute.xlu0 1
      %580 = vperm.xlu0 %579, %v265
      %v581 = vpop.permute.xlu0 %580
      %582 = vset.pattern.permute.xlu0 1
      %583 = vperm.xlu0 %582, %v266
      %v584 = vpop.permute.xlu0 %583
      %585 = vset.pattern.permute.xlu0 1
      %586 = vperm.xlu0 %585, %v267
      %v587 = vpop.permute.xlu0 %586
      %588 = vset.pattern.permute.xlu0 1
      %589 = vperm.xlu0 %588, %v268
      %v590 = vpop.permute.xlu0 %589
      %591 = vset.pattern.permute.xlu0 1
      %592 = vperm.xlu0 %591, %v269
      %v593 = vpop.permute.xlu0 %592
      %594 = vset.pattern.permute.xlu0 1
      %595 = vperm.xlu0 %594, %v270
      %v596 = vpop.permute.xlu0 %595
      %597 = vset.pattern.permute.xlu0 1
      %598 = vperm.xlu0 %597, %v271
      %v599 = vpop.permute.xlu0 %598
      %vm600 = vcmp.eq.s32.totalorder %v554, %v286
      %vm601 = vcmp.eq.s32.totalorder %v557, %v286
      %vm602 = vcmp.eq.s32.totalorder %v560, %v286
      %vm603 = vcmp.eq.s32.totalorder %v563, %v286
      %vm604 = vcmp.eq.s32.totalorder %v566, %v286
      %vm605 = vcmp.eq.s32.totalorder %v569, %v286
      %vm606 = vcmp.eq.s32.totalorder %v572, %v286
      %vm607 = vcmp.eq.s32.totalorder %v575, %v286
      %vm608 = vcmp.eq.s32.totalorder %v578, %v286
      %vm609 = vcmp.eq.s32.totalorder %v581, %v286
      %vm610 = vcmp.eq.s32.totalorder %v584, %v286
      %vm611 = vcmp.eq.s32.totalorder %v587, %v286
      %vm612 = vcmp.eq.s32.totalorder %v590, %v286
      %vm613 = vcmp.eq.s32.totalorder %v593, %v286
      %vm614 = vcmp.eq.s32.totalorder %v596, %v286
      %vm615 = vcmp.eq.s32.totalorder %v599, %v286
      %v616 = vsel %vm600, 1.0, 0.0
      %v617 = vsel %vm601, 1.0, 0.0
      %v618 = vsel %vm602, 1.0, 0.0
      %v619 = vsel %vm603, 1.0, 0.0
      %v620 = vsel %vm604, 1.0, 0.0
      %v621 = vsel %vm605, 1.0, 0.0
      %v622 = vsel %vm606, 1.0, 0.0
      %v623 = vsel %vm607, 1.0, 0.0
      %v624 = vsel %vm608, 1.0, 0.0
      %v625 = vsel %vm609, 1.0, 0.0
      %v626 = vsel %vm610, 1.0, 0.0
      %v627 = vsel %vm611, 1.0, 0.0
      %v628 = vsel %vm612, 1.0, 0.0
      %v629 = vsel %vm613, 1.0, 0.0
      %v630 = vsel %vm614, 1.0, 0.0
      %v631 = vsel %vm615, 1.0, 0.0
      %v632 = vpack.c.bf16 %v617, %v616
      %v633 = vpack.c.bf16 %v619, %v618
      %v634 = vpack.c.bf16 %v621, %v620
      %v635 = vpack.c.bf16 %v623, %v622
      %v636 = vpack.c.bf16 %v625, %v624
      %v637 = vpack.c.bf16 %v627, %v626
      %v638 = vpack.c.bf16 %v629, %v628
      %v639 = vpack.c.bf16 %v631, %v630
      %v641 = vsel %vm414, %v632, 0
      %v644 = vsel %vm414, %v633, 0
      %v647 = vsel %vm414, %v634, 0
      %v650 = vsel %vm414, %v635, 0
      %v653 = vsel %vm414, %v636, 0
      %v656 = vsel %vm414, %v637, 0
      %v659 = vsel %vm414, %v638, 0
      %v662 = vsel %vm414, %v639, 0
      %664 = vmatprep.subr.bf16.mxu0 0
      %665 = vmatpush1.bf16.msra.mxu0 0
      %666 = vmatprep.subr.bf16.mxu0 0
      %667 = vmatpush1.bf16.msra.mxu0 %v441
      %668 = vmatprep.subr.bf16.mxu0 0
      %669 = vmatpush1.bf16.msra.mxu0 %v406
      %670 = vmatprep.subr.bf16.mxu0 0
      %671 = vmatpush1.bf16.msra.mxu0 %v405
      %672 = vmatprep.subr.bf16.mxu0 0
      %673 = vmatpush1.bf16.msra.mxu0 %v404
      %674 = vmatprep.subr.bf16.mxu0 0
      %675 = vmatpush1.bf16.msra.mxu0 %v403
      %676 = vmatprep.subr.bf16.mxu0 0
      %677 = vmatpush1.bf16.msra.mxu0 %v402
      %678 = vmatprep.subr.bf16.mxu0 0
      %679 = vmatpush1.bf16.msra.mxu0 %v401
      %680 = vmatprep.subr.bf16.mxu0 0
      %681 = vmatpush2.bf16.msra.mxu0 0
      %682 = vmatprep.subr.bf16.mxu0 0
      %683 = vmatpush2.bf16.msra.mxu0 0
      %684 = vmatprep.subr.bf16.mxu0 0
      %685 = vmatpush2.bf16.msra.mxu0 0
      %686 = vmatprep.subr.bf16.mxu0 0
      %687 = vmatpush2.bf16.msra.mxu0 0
      %688 = vmatprep.subr.bf16.mxu0 0
      %689 = vmatpush2.bf16.msra.mxu0 0
      %690 = vmatprep.subr.bf16.mxu0 0
      %691 = vmatpush2.bf16.msra.mxu0 0
      %692 = vmatprep.subr.bf16.mxu0 0
      %693 = vmatpush2.bf16.msra.mxu0 0
      %694 = vmatprep.subr.bf16.mxu0 0
      %695 = vmatpush2.bf16.msra.mxu0 0
      %696 = vmatprep.mubr.bf16.mxu0 0
      %697 = vmatmul.mubr.bf16.gmra.mxu0 %v641
      %v698 = vpop.f32.mrf.mxu0
      %v699 = vadd.f32 0.0, %v698
      %v700 = vpop.f32.mrf.mxu0
      %v701 = vpop.f32.mrf.mxu0
      %v702 = vadd.f32 0.0, %v701
      %v703 = vpop.f32.mrf.mxu0
      %704 = vmatprep.mubr.bf16.mxu0 0
      %705 = vmatmul.mubr.bf16.gmra.mxu0 %v644
      %v706 = vpop.f32.mrf.mxu0
      %v707 = vadd.f32 0.0, %v706
      %v708 = vpop.f32.mrf.mxu0
      %v709 = vpop.f32.mrf.mxu0
      %v710 = vadd.f32 0.0, %v709
      %v711 = vpop.f32.mrf.mxu0
      %712 = vmatprep.mubr.bf16.mxu0 0
      %713 = vmatmul.mubr.bf16.gmra.mxu0 %v647
      %v714 = vpop.f32.mrf.mxu0
      %v715 = vadd.f32 0.0, %v714
      %v716 = vpop.f32.mrf.mxu0
      %v717 = vpop.f32.mrf.mxu0
      %v718 = vadd.f32 0.0, %v717
      %v719 = vpop.f32.mrf.mxu0
      %720 = vmatprep.mubr.bf16.mxu0 0
      %721 = vmatmul.mubr.bf16.gmra.mxu0 %v650
      %v722 = vpop.f32.mrf.mxu0
      %v723 = vadd.f32 0.0, %v722
      %v724 = vpop.f32.mrf.mxu0
      %v725 = vpop.f32.mrf.mxu0
      %v726 = vadd.f32 0.0, %v725
      %v727 = vpop.f32.mrf.mxu0
      %728 = vmatprep.mubr.bf16.mxu0 0
      %729 = vmatmul.mubr.bf16.gmra.mxu0 %v653
      %v730 = vpop.f32.mrf.mxu0
      %v731 = vadd.f32 0.0, %v730
      %v732 = vpop.f32.mrf.mxu0
      %v733 = vpop.f32.mrf.mxu0
      %v734 = vadd.f32 0.0, %v733
      %v735 = vpop.f32.mrf.mxu0
      %736 = vmatprep.mubr.bf16.mxu0 0
      %737 = vmatmul.mubr.bf16.gmra.mxu0 %v656
      %v738 = vpop.f32.mrf.mxu0
      %v739 = vadd.f32 0.0, %v738
      %v740 = vpop.f32.mrf.mxu0
      %v741 = vpop.f32.mrf.mxu0
      %v742 = vadd.f32 0.0, %v741
      %v743 = vpop.f32.mrf.mxu0
      %744 = vmatprep.mubr.bf16.mxu0 0
      %745 = vmatmul.mubr.bf16.gmra.mxu0 %v659
      %v746 = vpop.f32.mrf.mxu0
      %v747 = vadd.f32 0.0, %v746
      %v748 = vpop.f32.mrf.mxu0
      %v749 = vpop.f32.mrf.mxu0
      %v750 = vadd.f32 0.0, %v749
      %v751 = vpop.f32.mrf.mxu0
      %752 = vmatprep.mubr.bf16.mxu0 0
      %753 = vmatmul.mubr.bf16.gmra.mxu0 %v662
      %v754 = vpop.f32.mrf.mxu0
      %v755 = vadd.f32 0.0, %v754
      %v756 = vpop.f32.mrf.mxu0
      %v757 = vpop.f32.mrf.mxu0
      %v758 = vadd.f32 0.0, %v757
      %v759 = vpop.f32.mrf.mxu0
      %760 = vdwg.mxu0
      %v761 = vpack.c.bf16 %v702, %v699
      %v762 = vpack.c.bf16 %v710, %v707
      %v763 = vpack.c.bf16 %v718, %v715
      %v764 = vpack.c.bf16 %v726, %v723
      %v765 = vpack.c.bf16 %v734, %v731
      %v766 = vpack.c.bf16 %v742, %v739
      %v767 = vpack.c.bf16 %v750, %v747
      %v768 = vpack.c.bf16 %v758, %v755
      %v769 = vld [vmem:[%s2 + $0x10] sm:$0xf]
      %v770 = vld [vmem:[%s2 + $0x14] sm:$0xf]
      %v771 = vld [vmem:[%s2 + $0x18] sm:$0xf]
      %v772 = vld [vmem:[%s2 + $0x1c] sm:$0xf]
      %v777 = vunpack.c.l.b16 %v769
      %v778 = vunpack.c.l.b16 %v770
      %v779 = vunpack.c.l.b16 %v771
      %v780 = vunpack.c.l.b16 %v772
      %v781 = vpack.c.b16 %v778, %v777
      %v782 = vpack.c.b16 %v780, %v779
      %vm785 = vcmask 261120
      %v787 = vsel %vm785, %v761, 0
      %v790 = vsel %vm785, %v762, 0
      %v793 = vsel %vm785, %v763, 0
      %v796 = vsel %vm785, %v764, 0
      %v799 = vsel %vm785, %v765, 0
      %v802 = vsel %vm785, %v766, 0
      %v805 = vsel %vm785, %v767, 0
      %v808 = vsel %vm785, %v768, 0
      %810 = vmatprep.subr.bf16.mxu0 0
      %811 = vmatpush1.bf16.msra.mxu0 0
      %812 = vmatprep.subr.bf16.mxu0 0
      %813 = vmatpush1.bf16.msra.mxu0 0
      %814 = vmatprep.subr.bf16.mxu0 0
      %815 = vmatpush1.bf16.msra.mxu0 0
      %816 = vmatprep.subr.bf16.mxu0 0
      %817 = vmatpush1.bf16.msra.mxu0 0
      %818 = vmatprep.subr.bf16.mxu0 0
      %819 = vmatpush1.bf16.msra.mxu0 0
      %820 = vmatprep.subr.bf16.mxu0 0
      %821 = vmatpush1.bf16.msra.mxu0 0
      %822 = vmatprep.subr.bf16.mxu0 0
      %823 = vmatpush1.bf16.msra.mxu0 %v782
      %824 = vmatprep.subr.bf16.mxu0 0
      %825 = vmatpush1.bf16.msra.mxu0 %v781
      %826 = vmatprep.subr.bf16.mxu0 0
      %827 = vmatpush2.bf16.msra.mxu0 0
      %828 = vmatprep.subr.bf16.mxu0 0
      %829 = vmatpush2.bf16.msra.mxu0 0
      %830 = vmatprep.subr.bf16.mxu0 0
      %831 = vmatpush2.bf16.msra.mxu0 0
      %832 = vmatprep.subr.bf16.mxu0 0
      %833 = vmatpush2.bf16.msra.mxu0 0
      %834 = vmatprep.subr.bf16.mxu0 0
      %835 = vmatpush2.bf16.msra.mxu0 0
      %836 = vmatprep.subr.bf16.mxu0 0
      %837 = vmatpush2.bf16.msra.mxu0 0
      %838 = vmatprep.subr.bf16.mxu0 0
      %839 = vmatpush2.bf16.msra.mxu0 0
      %840 = vmatprep.subr.bf16.mxu0 0
      %841 = vmatpush2.bf16.msra.mxu0 0
      %842 = vmatprep.mubr.bf16.mxu0 0
      %843 = vmatmul.mubr.bf16.gmra.mxu0 %v787
      %v844 = vpop.f32.mrf.mxu0
      %v845 = vadd.f32 0.0, %v844
      %v846 = vpop.f32.mrf.mxu0
      %v847 = vpop.f32.mrf.mxu0
      %v848 = vadd.f32 0.0, %v847
      %v849 = vpop.f32.mrf.mxu0
      %850 = vmatprep.mubr.bf16.mxu0 0
      %851 = vmatmul.mubr.bf16.gmra.mxu0 %v790
      %v852 = vpop.f32.mrf.mxu0
      %v853 = vadd.f32 0.0, %v852
      %v854 = vpop.f32.mrf.mxu0
      %v855 = vpop.f32.mrf.mxu0
      %v856 = vadd.f32 0.0, %v855
      %v857 = vpop.f32.mrf.mxu0
      %858 = vmatprep.mubr.bf16.mxu0 0
      %859 = vmatmul.mubr.bf16.gmra.mxu0 %v793
      %v860 = vpop.f32.mrf.mxu0
      %v861 = vadd.f32 0.0, %v860
      %v862 = vpop.f32.mrf.mxu0
      %v863 = vpop.f32.mrf.mxu0
      %v864 = vadd.f32 0.0, %v863
      %v865 = vpop.f32.mrf.mxu0
      %866 = vmatprep.mubr.bf16.mxu0 0
      %867 = vmatmul.mubr.bf16.gmra.mxu0 %v796
      %v868 = vpop.f32.mrf.mxu0
      %v869 = vadd.f32 0.0, %v868
      %v870 = vpop.f32.mrf.mxu0
      %v871 = vpop.f32.mrf.mxu0
      %v872 = vadd.f32 0.0, %v871
      %v873 = vpop.f32.mrf.mxu0
      %874 = vmatprep.mubr.bf16.mxu0 0
      %875 = vmatmul.mubr.bf16.gmra.mxu0 %v799
      %v876 = vpop.f32.mrf.mxu0
      %v877 = vadd.f32 0.0, %v876
      %v878 = vpop.f32.mrf.mxu0
      %v879 = vpop.f32.mrf.mxu0
      %v880 = vadd.f32 0.0, %v879
      %v881 = vpop.f32.mrf.mxu0
      %882 = vmatprep.mubr.bf16.mxu0 0
      %883 = vmatmul.mubr.bf16.gmra.mxu0 %v802
      %v884 = vpop.f32.mrf.mxu0
      %v885 = vadd.f32 0.0, %v884
      %v886 = vpop.f32.mrf.mxu0
      %v887 = vpop.f32.mrf.mxu0
      %v888 = vadd.f32 0.0, %v887
      %v889 = vpop.f32.mrf.mxu0
      %890 = vmatprep.mubr.bf16.mxu0 0
      %891 = vmatmul.mubr.bf16.gmra.mxu0 %v805
      %v892 = vpop.f32.mrf.mxu0
      %v893 = vadd.f32 0.0, %v892
      %v894 = vpop.f32.mrf.mxu0
      %v895 = vpop.f32.mrf.mxu0
      %v896 = vadd.f32 0.0, %v895
      %v897 = vpop.f32.mrf.mxu0
      %898 = vmatprep.mubr.bf16.mxu0 0
      %899 = vmatmul.mubr.bf16.gmra.mxu0 %v808
      %v900 = vpop.f32.mrf.mxu0
      %v901 = vadd.f32 0.0, %v900
      %v902 = vpop.f32.mrf.mxu0
      %v903 = vpop.f32.mrf.mxu0
      %v904 = vadd.f32 0.0, %v903
      %v905 = vpop.f32.mrf.mxu0
      %906 = vdwg.mxu0
      %v911 = vunpack.c.l.b16 %v548
      %v912 = vunpack.c.l.b16 %v549
      %v913 = vunpack.c.l.b16 %v550
      %v914 = vunpack.c.l.b16 %v551
      %v915 = vpack.c.b16 %v912, %v911
      %v916 = vpack.c.b16 %v914, %v913
      %v920 = vsel %vm785, %v540, 0
      %v923 = vsel %vm785, %v541, 0
      %v926 = vsel %vm785, %v542, 0
      %v929 = vsel %vm785, %v543, 0
      %v932 = vsel %vm785, %v544, 0
      %v935 = vsel %vm785, %v545, 0
      %v938 = vsel %vm785, %v546, 0
      %v941 = vsel %vm785, %v547, 0
      %943 = vmatprep.subr.bf16.mxu0 0
      %944 = vmatpush1.bf16.msra.mxu0 0
      %945 = vmatprep.subr.bf16.mxu0 0
      %946 = vmatpush1.bf16.msra.mxu0 0
      %947 = vmatprep.subr.bf16.mxu0 0
      %948 = vmatpush1.bf16.msra.mxu0 0
      %949 = vmatprep.subr.bf16.mxu0 0
      %950 = vmatpush1.bf16.msra.mxu0 0
      %951 = vmatprep.subr.bf16.mxu0 0
      %952 = vmatpush1.bf16.msra.mxu0 0
      %953 = vmatprep.subr.bf16.mxu0 0
      %954 = vmatpush1.bf16.msra.mxu0 0
      %955 = vmatprep.subr.bf16.mxu0 0
      %956 = vmatpush1.bf16.msra.mxu0 %v916
      %957 = vmatprep.subr.bf16.mxu0 0
      %958 = vmatpush1.bf16.msra.mxu0 %v915
      %959 = vmatprep.subr.bf16.mxu0 0
      %960 = vmatpush2.bf16.msra.mxu0 0
      %961 = vmatprep.subr.bf16.mxu0 0
      %962 = vmatpush2.bf16.msra.mxu0 0
      %963 = vmatprep.subr.bf16.mxu0 0
      %964 = vmatpush2.bf16.msra.mxu0 0
      %965 = vmatprep.subr.bf16.mxu0 0
      %966 = vmatpush2.bf16.msra.mxu0 0
      %967 = vmatprep.subr.bf16.mxu0 0
      %968 = vmatpush2.bf16.msra.mxu0 0
      %969 = vmatprep.subr.bf16.mxu0 0
      %970 = vmatpush2.bf16.msra.mxu0 0
      %971 = vmatprep.subr.bf16.mxu0 0
      %972 = vmatpush2.bf16.msra.mxu0 0
      %973 = vmatprep.subr.bf16.mxu0 0
      %974 = vmatpush2.bf16.msra.mxu0 0
      %975 = vmatprep.mubr.bf16.mxu0 0
      %976 = vmatmul.mubr.bf16.gmra.mxu0 %v920
      %v977 = vpop.f32.mrf.mxu0
      %v978 = vadd.f32 %v845, %v977
      %v979 = vpop.f32.mrf.mxu0
      %v980 = vpop.f32.mrf.mxu0
      %v981 = vadd.f32 %v848, %v980
      %v982 = vpop.f32.mrf.mxu0
      %983 = vmatprep.mubr.bf16.mxu0 0
      %984 = vmatmul.mubr.bf16.gmra.mxu0 %v923
      %v985 = vpop.f32.mrf.mxu0
      %v986 = vadd.f32 %v853, %v985
      %v987 = vpop.f32.mrf.mxu0
      %v988 = vpop.f32.mrf.mxu0
      %v989 = vadd.f32 %v856, %v988
      %v990 = vpop.f32.mrf.mxu0
      %991 = vmatprep.mubr.bf16.mxu0 0
      %992 = vmatmul.mubr.bf16.gmra.mxu0 %v926
      %v993 = vpop.f32.mrf.mxu0
      %v994 = vadd.f32 %v861, %v993
      %v995 = vpop.f32.mrf.mxu0
      %v996 = vpop.f32.mrf.mxu0
      %v997 = vadd.f32 %v864, %v996
      %v998 = vpop.f32.mrf.mxu0
      %999 = vmatprep.mubr.bf16.mxu0 0
      %1000 = vmatmul.mubr.bf16.gmra.mxu0 %v929
      %v1001 = vpop.f32.mrf.mxu0
      %v1002 = vadd.f32 %v869, %v1001
      %v1003 = vpop.f32.mrf.mxu0
      %v1004 = vpop.f32.mrf.mxu0
      %v1005 = vadd.f32 %v872, %v1004
      %v1006 = vpop.f32.mrf.mxu0
      %1007 = vmatprep.mubr.bf16.mxu0 0
      %1008 = vmatmul.mubr.bf16.gmra.mxu0 %v932
      %v1009 = vpop.f32.mrf.mxu0
      %v1010 = vadd.f32 %v877, %v1009
      %v1011 = vpop.f32.mrf.mxu0
      %v1012 = vpop.f32.mrf.mxu0
      %v1013 = vadd.f32 %v880, %v1012
      %v1014 = vpop.f32.mrf.mxu0
      %1015 = vmatprep.mubr.bf16.mxu0 0
      %1016 = vmatmul.mubr.bf16.gmra.mxu0 %v935
      %v1017 = vpop.f32.mrf.mxu0
      %v1018 = vadd.f32 %v885, %v1017
      %v1019 = vpop.f32.mrf.mxu0
      %v1020 = vpop.f32.mrf.mxu0
      %v1021 = vadd.f32 %v888, %v1020
      %v1022 = vpop.f32.mrf.mxu0
      %1023 = vmatprep.mubr.bf16.mxu0 0
      %1024 = vmatmul.mubr.bf16.gmra.mxu0 %v938
      %v1025 = vpop.f32.mrf.mxu0
      %v1026 = vadd.f32 %v893, %v1025
      %v1027 = vpop.f32.mrf.mxu0
      %v1028 = vpop.f32.mrf.mxu0
      %v1029 = vadd.f32 %v896, %v1028
      %v1030 = vpop.f32.mrf.mxu0
      %1031 = vmatprep.mubr.bf16.mxu0 0
      %1032 = vmatmul.mubr.bf16.gmra.mxu0 %v941
      %v1033 = vpop.f32.mrf.mxu0
      %v1034 = vadd.f32 %v901, %v1033
      %v1035 = vpop.f32.mrf.mxu0
      %v1036 = vpop.f32.mrf.mxu0
      %v1037 = vadd.f32 %v904, %v1036
      %v1038 = vpop.f32.mrf.mxu0
      %1039 = vdwg.mxu0
      %1040 = vset.pattern.permute.xlu0 2
      %1041 = vperm.xlu0 %1040, %v256
      %v1042 = vpop.permute.xlu0 %1041
      %1043 = vset.pattern.permute.xlu0 2
      %1044 = vperm.xlu0 %1043, %v257
      %v1045 = vpop.permute.xlu0 %1044
      %1046 = vset.pattern.permute.xlu0 2
      %1047 = vperm.xlu0 %1046, %v258
      %v1048 = vpop.permute.xlu0 %1047
      %1049 = vset.pattern.permute.xlu0 2
      %1050 = vperm.xlu0 %1049, %v259
      %v1051 = vpop.permute.xlu0 %1050
      %1052 = vset.pattern.permute.xlu0 2
      %1053 = vperm.xlu0 %1052, %v260
      %v1054 = vpop.permute.xlu0 %1053
      %1055 = vset.pattern.permute.xlu0 2
      %1056 = vperm.xlu0 %1055, %v261
      %v1057 = vpop.permute.xlu0 %1056
      %1058 = vset.pattern.permute.xlu0 2
      %1059 = vperm.xlu0 %1058, %v262
      %v1060 = vpop.permute.xlu0 %1059
      %1061 = vset.pattern.permute.xlu0 2
      %1062 = vperm.xlu0 %1061, %v263
      %v1063 = vpop.permute.xlu0 %1062
      %1064 = vset.pattern.permute.xlu0 2
      %1065 = vperm.xlu0 %1064, %v264
      %v1066 = vpop.permute.xlu0 %1065
      %1067 = vset.pattern.permute.xlu0 2
      %1068 = vperm.xlu0 %1067, %v265
      %v1069 = vpop.permute.xlu0 %1068
      %1070 = vset.pattern.permute.xlu0 2
      %1071 = vperm.xlu0 %1070, %v266
      %v1072 = vpop.permute.xlu0 %1071
      %1073 = vset.pattern.permute.xlu0 2
      %1074 = vperm.xlu0 %1073, %v267
      %v1075 = vpop.permute.xlu0 %1074
      %1076 = vset.pattern.permute.xlu0 2
      %1077 = vperm.xlu0 %1076, %v268
      %v1078 = vpop.permute.xlu0 %1077
      %1079 = vset.pattern.permute.xlu0 2
      %1080 = vperm.xlu0 %1079, %v269
      %v1081 = vpop.permute.xlu0 %1080
      %1082 = vset.pattern.permute.xlu0 2
      %1083 = vperm.xlu0 %1082, %v270
      %v1084 = vpop.permute.xlu0 %1083
      %1085 = vset.pattern.permute.xlu0 2
      %1086 = vperm.xlu0 %1085, %v271
      %v1087 = vpop.permute.xlu0 %1086
      %vm1088 = vcmp.eq.s32.totalorder %v1042, %v286
      %vm1089 = vcmp.eq.s32.totalorder %v1045, %v286
      %vm1090 = vcmp.eq.s32.totalorder %v1048, %v286
      %vm1091 = vcmp.eq.s32.totalorder %v1051, %v286
      %vm1092 = vcmp.eq.s32.totalorder %v1054, %v286
      %vm1093 = vcmp.eq.s32.totalorder %v1057, %v286
      %vm1094 = vcmp.eq.s32.totalorder %v1060, %v286
      %vm1095 = vcmp.eq.s32.totalorder %v1063, %v286
      %vm1096 = vcmp.eq.s32.totalorder %v1066, %v286
      %vm1097 = vcmp.eq.s32.totalorder %v1069, %v286
      %vm1098 = vcmp.eq.s32.totalorder %v1072, %v286
      %vm1099 = vcmp.eq.s32.totalorder %v1075, %v286
      %vm1100 = vcmp.eq.s32.totalorder %v1078, %v286
      %vm1101 = vcmp.eq.s32.totalorder %v1081, %v286
      %vm1102 = vcmp.eq.s32.totalorder %v1084, %v286
      %vm1103 = vcmp.eq.s32.totalorder %v1087, %v286
      %v1104 = vsel %vm1088, 1.0, 0.0
      %v1105 = vsel %vm1089, 1.0, 0.0
      %v1106 = vsel %vm1090, 1.0, 0.0
      %v1107 = vsel %vm1091, 1.0, 0.0
      %v1108 = vsel %vm1092, 1.0, 0.0
      %v1109 = vsel %vm1093, 1.0, 0.0
      %v1110 = vsel %vm1094, 1.0, 0.0
      %v1111 = vsel %vm1095, 1.0, 0.0
      %v1112 = vsel %vm1096, 1.0, 0.0
      %v1113 = vsel %vm1097, 1.0, 0.0
      %v1114 = vsel %vm1098, 1.0, 0.0
      %v1115 = vsel %vm1099, 1.0, 0.0
      %v1116 = vsel %vm1100, 1.0, 0.0
      %v1117 = vsel %vm1101, 1.0, 0.0
      %v1118 = vsel %vm1102, 1.0, 0.0
      %v1119 = vsel %vm1103, 1.0, 0.0
      %v1120 = vpack.c.bf16 %v1105, %v1104
      %v1121 = vpack.c.bf16 %v1107, %v1106
      %v1122 = vpack.c.bf16 %v1109, %v1108
      %v1123 = vpack.c.bf16 %v1111, %v1110
      %v1124 = vpack.c.bf16 %v1113, %v1112
      %v1125 = vpack.c.bf16 %v1115, %v1114
      %v1126 = vpack.c.bf16 %v1117, %v1116
      %v1127 = vpack.c.bf16 %v1119, %v1118
      %v1129 = vsel %vm414, %v1120, 0
      %v1132 = vsel %vm414, %v1121, 0
      %v1135 = vsel %vm414, %v1122, 0
      %v1138 = vsel %vm414, %v1123, 0
      %v1141 = vsel %vm414, %v1124, 0
      %v1144 = vsel %vm414, %v1125, 0
      %v1147 = vsel %vm414, %v1126, 0
      %v1150 = vsel %vm414, %v1127, 0
      %1152 = vmatprep.subr.bf16.mxu0 0
      %1153 = vmatpush1.bf16.msra.mxu0 0
      %1154 = vmatprep.subr.bf16.mxu0 0
      %1155 = vmatpush1.bf16.msra.mxu0 %v441
      %1156 = vmatprep.subr.bf16.mxu0 0
      %1157 = vmatpush1.bf16.msra.mxu0 %v406
      %1158 = vmatprep.subr.bf16.mxu0 0
      %1159 = vmatpush1.bf16.msra.mxu0 %v405
      %1160 = vmatprep.subr.bf16.mxu0 0
      %1161 = vmatpush1.bf16.msra.mxu0 %v404
      %1162 = vmatprep.subr.bf16.mxu0 0
      %1163 = vmatpush1.bf16.msra.mxu0 %v403
      %1164 = vmatprep.subr.bf16.mxu0 0
      %1165 = vmatpush1.bf16.msra.mxu0 %v402
      %1166 = vmatprep.subr.bf16.mxu0 0
      %1167 = vmatpush1.bf16.msra.mxu0 %v401
      %1168 = vmatprep.subr.bf16.mxu0 0
      %1169 = vmatpush2.bf16.msra.mxu0 0
      %1170 = vmatprep.subr.bf16.mxu0 0
      %1171 = vmatpush2.bf16.msra.mxu0 0
      %1172 = vmatprep.subr.bf16.mxu0 0
      %1173 = vmatpush2.bf16.msra.mxu0 0
      %1174 = vmatprep.subr.bf16.mxu0 0
      %1175 = vmatpush2.bf16.msra.mxu0 0
      %1176 = vmatprep.subr.bf16.mxu0 0
      %1177 = vmatpush2.bf16.msra.mxu0 0
      %1178 = vmatprep.subr.bf16.mxu0 0
      %1179 = vmatpush2.bf16.msra.mxu0 0
      %1180 = vmatprep.subr.bf16.mxu0 0
      %1181 = vmatpush2.bf16.msra.mxu0 0
      %1182 = vmatprep.subr.bf16.mxu0 0
      %1183 = vmatpush2.bf16.msra.mxu0 0
      %1184 = vmatprep.mubr.bf16.mxu0 0
      %1185 = vmatmul.mubr.bf16.gmra.mxu0 %v1129
      %v1186 = vpop.f32.mrf.mxu0
      %v1187 = vadd.f32 0.0, %v1186
      %v1188 = vpop.f32.mrf.mxu0
      %v1189 = vpop.f32.mrf.mxu0
      %v1190 = vadd.f32 0.0, %v1189
      %v1191 = vpop.f32.mrf.mxu0
      %1192 = vmatprep.mubr.bf16.mxu0 0
      %1193 = vmatmul.mubr.bf16.gmra.mxu0 %v1132
      %v1194 = vpop.f32.mrf.mxu0
      %v1195 = vadd.f32 0.0, %v1194
      %v1196 = vpop.f32.mrf.mxu0
      %v1197 = vpop.f32.mrf.mxu0
      %v1198 = vadd.f32 0.0, %v1197
      %v1199 = vpop.f32.mrf.mxu0
      %1200 = vmatprep.mubr.bf16.mxu0 0
      %1201 = vmatmul.mubr.bf16.gmra.mxu0 %v1135
      %v1202 = vpop.f32.mrf.mxu0
      %v1203 = vadd.f32 0.0, %v1202
      %v1204 = vpop.f32.mrf.mxu0
      %v1205 = vpop.f32.mrf.mxu0
      %v1206 = vadd.f32 0.0, %v1205
      %v1207 = vpop.f32.mrf.mxu0
      %1208 = vmatprep.mubr.bf16.mxu0 0
      %1209 = vmatmul.mubr.bf16.gmra.mxu0 %v1138
      %v1210 = vpop.f32.mrf.mxu0
      %v1211 = vadd.f32 0.0, %v1210
      %v1212 = vpop.f32.mrf.mxu0
      %v1213 = vpop.f32.mrf.mxu0
      %v1214 = vadd.f32 0.0, %v1213
      %v1215 = vpop.f32.mrf.mxu0
      %1216 = vmatprep.mubr.bf16.mxu0 0
      %1217 = vmatmul.mubr.bf16.gmra.mxu0 %v1141
      %v1218 = vpop.f32.mrf.mxu0
      %v1219 = vadd.f32 0.0, %v1218
      %v1220 = vpop.f32.mrf.mxu0
      %v1221 = vpop.f32.mrf.mxu0
      %v1222 = vadd.f32 0.0, %v1221
      %v1223 = vpop.f32.mrf.mxu0
      %1224 = vmatprep.mubr.bf16.mxu0 0
      %1225 = vmatmul.mubr.bf16.gmra.mxu0 %v1144
      %v1226 = vpop.f32.mrf.mxu0
      %v1227 = vadd.f32 0.0, %v1226
      %v1228 = vpop.f32.mrf.mxu0
      %v1229 = vpop.f32.mrf.mxu0
      %v1230 = vadd.f32 0.0, %v1229
      %v1231 = vpop.f32.mrf.mxu0
      %1232 = vmatprep.mubr.bf16.mxu0 0
      %1233 = vmatmul.mubr.bf16.gmra.mxu0 %v1147
      %v1234 = vpop.f32.mrf.mxu0
      %v1235 = vadd.f32 0.0, %v1234
      %v1236 = vpop.f32.mrf.mxu0
      %v1237 = vpop.f32.mrf.mxu0
      %v1238 = vadd.f32 0.0, %v1237
      %v1239 = vpop.f32.mrf.mxu0
      %1240 = vmatprep.mubr.bf16.mxu0 0
      %1241 = vmatmul.mubr.bf16.gmra.mxu0 %v1150
      %v1242 = vpop.f32.mrf.mxu0
      %v1243 = vadd.f32 0.0, %v1242
      %v1244 = vpop.f32.mrf.mxu0
      %v1245 = vpop.f32.mrf.mxu0
      %v1246 = vadd.f32 0.0, %v1245
      %v1247 = vpop.f32.mrf.mxu0
      %1248 = vdwg.mxu0
      %v1249 = vpack.c.bf16 %v1190, %v1187
      %v1250 = vpack.c.bf16 %v1198, %v1195
      %v1251 = vpack.c.bf16 %v1206, %v1203
      %v1252 = vpack.c.bf16 %v1214, %v1211
      %v1253 = vpack.c.bf16 %v1222, %v1219
      %v1254 = vpack.c.bf16 %v1230, %v1227
      %v1255 = vpack.c.bf16 %v1238, %v1235
      %v1256 = vpack.c.bf16 %v1246, %v1243
      %v1257 = vld [vmem:[%s2 + $0x20] sm:$0xf]
      %v1258 = vld [vmem:[%s2 + $0x24] sm:$0xf]
      %v1259 = vld [vmem:[%s2 + $0x28] sm:$0xf]
      %v1260 = vld [vmem:[%s2 + $0x2c] sm:$0xf]
      %v1265 = vunpack.c.l.b16 %v1257
      %v1266 = vunpack.c.l.b16 %v1258
      %v1267 = vunpack.c.l.b16 %v1259
      %v1268 = vunpack.c.l.b16 %v1260
      %v1269 = vpack.c.b16 %v1266, %v1265
      %v1270 = vpack.c.b16 %v1268, %v1267
      %v1274 = vsel %vm785, %v1249, 0
      %v1277 = vsel %vm785, %v1250, 0
      %v1280 = vsel %vm785, %v1251, 0
      %v1283 = vsel %vm785, %v1252, 0
      %v1286 = vsel %vm785, %v1253, 0
      %v1289 = vsel %vm785, %v1254, 0
      %v1292 = vsel %vm785, %v1255, 0
      %v1295 = vsel %vm785, %v1256, 0
      %1297 = vmatprep.subr.bf16.mxu0 0
      %1298 = vmatpush1.bf16.msra.mxu0 0
      %1299 = vmatprep.subr.bf16.mxu0 0
      %1300 = vmatpush1.bf16.msra.mxu0 0
      %1301 = vmatprep.subr.bf16.mxu0 0
      %1302 = vmatpush1.bf16.msra.mxu0 0
      %1303 = vmatprep.subr.bf16.mxu0 0
      %1304 = vmatpush1.bf16.msra.mxu0 0
      %1305 = vmatprep.subr.bf16.mxu0 0
      %1306 = vmatpush1.bf16.msra.mxu0 0
      %1307 = vmatprep.subr.bf16.mxu0 0
      %1308 = vmatpush1.bf16.msra.mxu0 0
      %1309 = vmatprep.subr.bf16.mxu0 0
      %1310 = vmatpush1.bf16.msra.mxu0 %v1270
      %1311 = vmatprep.subr.bf16.mxu0 0
      %1312 = vmatpush1.bf16.msra.mxu0 %v1269
      %1313 = vmatprep.subr.bf16.mxu0 0
      %1314 = vmatpush2.bf16.msra.mxu0 0
      %1315 = vmatprep.subr.bf16.mxu0 0
      %1316 = vmatpush2.bf16.msra.mxu0 0
      %1317 = vmatprep.subr.bf16.mxu0 0
      %1318 = vmatpush2.bf16.msra.mxu0 0
      %1319 = vmatprep.subr.bf16.mxu0 0
      %1320 = vmatpush2.bf16.msra.mxu0 0
      %1321 = vmatprep.subr.bf16.mxu0 0
      %1322 = vmatpush2.bf16.msra.mxu0 0
      %1323 = vmatprep.subr.bf16.mxu0 0
      %1324 = vmatpush2.bf16.msra.mxu0 0
      %1325 = vmatprep.subr.bf16.mxu0 0
      %1326 = vmatpush2.bf16.msra.mxu0 0
      %1327 = vmatprep.subr.bf16.mxu0 0
      %1328 = vmatpush2.bf16.msra.mxu0 0
      %1329 = vmatprep.mubr.bf16.mxu0 0
      %1330 = vmatmul.mubr.bf16.gmra.mxu0 %v1274
      %v1331 = vpop.f32.mrf.mxu0
      %v1332 = vadd.f32 0.0, %v1331
      %v1333 = vpop.f32.mrf.mxu0
      %v1334 = vpop.f32.mrf.mxu0
      %v1335 = vadd.f32 0.0, %v1334
      %v1336 = vpop.f32.mrf.mxu0
      %1337 = vmatprep.mubr.bf16.mxu0 0
      %1338 = vmatmul.mubr.bf16.gmra.mxu0 %v1277
      %v1339 = vpop.f32.mrf.mxu0
      %v1340 = vadd.f32 0.0, %v1339
      %v1341 = vpop.f32.mrf.mxu0
      %v1342 = vpop.f32.mrf.mxu0
      %v1343 = vadd.f32 0.0, %v1342
      %v1344 = vpop.f32.mrf.mxu0
      %1345 = vmatprep.mubr.bf16.mxu0 0
      %1346 = vmatmul.mubr.bf16.gmra.mxu0 %v1280
      %v1347 = vpop.f32.mrf.mxu0
      %v1348 = vadd.f32 0.0, %v1347
      %v1349 = vpop.f32.mrf.mxu0
      %v1350 = vpop.f32.mrf.mxu0
      %v1351 = vadd.f32 0.0, %v1350
      %v1352 = vpop.f32.mrf.mxu0
      %1353 = vmatprep.mubr.bf16.mxu0 0
      %1354 = vmatmul.mubr.bf16.gmra.mxu0 %v1283
      %v1355 = vpop.f32.mrf.mxu0
      %v1356 = vadd.f32 0.0, %v1355
      %v1357 = vpop.f32.mrf.mxu0
      %v1358 = vpop.f32.mrf.mxu0
      %v1359 = vadd.f32 0.0, %v1358
      %v1360 = vpop.f32.mrf.mxu0
      %1361 = vmatprep.mubr.bf16.mxu0 0
      %1362 = vmatmul.mubr.bf16.gmra.mxu0 %v1286
      %v1363 = vpop.f32.mrf.mxu0
      %v1364 = vadd.f32 0.0, %v1363
      %v1365 = vpop.f32.mrf.mxu0
      %v1366 = vpop.f32.mrf.mxu0
      %v1367 = vadd.f32 0.0, %v1366
      %v1368 = vpop.f32.mrf.mxu0
      %1369 = vmatprep.mubr.bf16.mxu0 0
      %1370 = vmatmul.mubr.bf16.gmra.mxu0 %v1289
      %v1371 = vpop.f32.mrf.mxu0
      %v1372 = vadd.f32 0.0, %v1371
      %v1373 = vpop.f32.mrf.mxu0
      %v1374 = vpop.f32.mrf.mxu0
      %v1375 = vadd.f32 0.0, %v1374
      %v1376 = vpop.f32.mrf.mxu0
      %1377 = vmatprep.mubr.bf16.mxu0 0
      %1378 = vmatmul.mubr.bf16.gmra.mxu0 %v1292
      %v1379 = vpop.f32.mrf.mxu0
      %v1380 = vadd.f32 0.0, %v1379
      %v1381 = vpop.f32.mrf.mxu0
      %v1382 = vpop.f32.mrf.mxu0
      %v1383 = vadd.f32 0.0, %v1382
      %v1384 = vpop.f32.mrf.mxu0
      %1385 = vmatprep.mubr.bf16.mxu0 0
      %1386 = vmatmul.mubr.bf16.gmra.mxu0 %v1295
      %v1387 = vpop.f32.mrf.mxu0
      %v1388 = vadd.f32 0.0, %v1387
      %v1389 = vpop.f32.mrf.mxu0
      %v1390 = vpop.f32.mrf.mxu0
      %v1391 = vadd.f32 0.0, %v1390
      %v1392 = vpop.f32.mrf.mxu0
      %1393 = vdwg.mxu0
      %v1394 = vadd.f32 %v978, %v1332
      %v1395 = vadd.f32 %v981, %v1335
      %v1396 = vadd.f32 %v986, %v1340
      %v1397 = vadd.f32 %v989, %v1343
      %v1398 = vadd.f32 %v994, %v1348
      %v1399 = vadd.f32 %v997, %v1351
      %v1400 = vadd.f32 %v1002, %v1356
      %v1401 = vadd.f32 %v1005, %v1359
      %v1402 = vadd.f32 %v1010, %v1364
      %v1403 = vadd.f32 %v1013, %v1367
      %v1404 = vadd.f32 %v1018, %v1372
      %v1405 = vadd.f32 %v1021, %v1375
      %v1406 = vadd.f32 %v1026, %v1380
      %v1407 = vadd.f32 %v1029, %v1383
      %v1408 = vadd.f32 %v1034, %v1388
      %v1409 = vadd.f32 %v1037, %v1391
      %1410 = vset.pattern.permute.xlu0 3
      %1411 = vperm.xlu0 %1410, %v256
      %v1412 = vpop.permute.xlu0 %1411
      %1413 = vset.pattern.permute.xlu0 3
      %1414 = vperm.xlu0 %1413, %v257
      %v1415 = vpop.permute.xlu0 %1414
      %1416 = vset.pattern.permute.xlu0 3
      %1417 = vperm.xlu0 %1416, %v258
      %v1418 = vpop.permute.xlu0 %1417
      %1419 = vset.pattern.permute.xlu0 3
      %1420 = vperm.xlu0 %1419, %v259
      %v1421 = vpop.permute.xlu0 %1420
      %1422 = vset.pattern.permute.xlu0 3
      %1423 = vperm.xlu0 %1422, %v260
      %v1424 = vpop.permute.xlu0 %1423
      %1425 = vset.pattern.permute.xlu0 3
      %1426 = vperm.xlu0 %1425, %v261
      %v1427 = vpop.permute.xlu0 %1426
      %1428 = vset.pattern.permute.xlu0 3
      %1429 = vperm.xlu0 %1428, %v262
      %v1430 = vpop.permute.xlu0 %1429
      %1431 = vset.pattern.permute.xlu0 3
      %1432 = vperm.xlu0 %1431, %v263
      %v1433 = vpop.permute.xlu0 %1432
      %1434 = vset.pattern.permute.xlu0 3
      %1435 = vperm.xlu0 %1434, %v264
      %v1436 = vpop.permute.xlu0 %1435
      %1437 = vset.pattern.permute.xlu0 3
      %1438 = vperm.xlu0 %1437, %v265
      %v1439 = vpop.permute.xlu0 %1438
      %1440 = vset.pattern.permute.xlu0 3
      %1441 = vperm.xlu0 %1440, %v266
      %v1442 = vpop.permute.xlu0 %1441
      %1443 = vset.pattern.permute.xlu0 3
      %1444 = vperm.xlu0 %1443, %v267
      %v1445 = vpop.permute.xlu0 %1444
      %1446 = vset.pattern.permute.xlu0 3
      %1447 = vperm.xlu0 %1446, %v268
      %v1448 = vpop.permute.xlu0 %1447
      %1449 = vset.pattern.permute.xlu0 3
      %1450 = vperm.xlu0 %1449, %v269
      %v1451 = vpop.permute.xlu0 %1450
      %1452 = vset.pattern.permute.xlu0 3
      %1453 = vperm.xlu0 %1452, %v270
      %v1454 = vpop.permute.xlu0 %1453
      %1455 = vset.pattern.permute.xlu0 3
      %1456 = vperm.xlu0 %1455, %v271
      %v1457 = vpop.permute.xlu0 %1456
      %vm1458 = vcmp.eq.s32.totalorder %v1412, %v286
      %vm1459 = vcmp.eq.s32.totalorder %v1415, %v286
      %vm1460 = vcmp.eq.s32.totalorder %v1418, %v286
      %vm1461 = vcmp.eq.s32.totalorder %v1421, %v286
      %vm1462 = vcmp.eq.s32.totalorder %v1424, %v286
      %vm1463 = vcmp.eq.s32.totalorder %v1427, %v286
      %vm1464 = vcmp.eq.s32.totalorder %v1430, %v286
      %vm1465 = vcmp.eq.s32.totalorder %v1433, %v286
      %vm1466 = vcmp.eq.s32.totalorder %v1436, %v286
      %vm1467 = vcmp.eq.s32.totalorder %v1439, %v286
      %vm1468 = vcmp.eq.s32.totalorder %v1442, %v286
      %vm1469 = vcmp.eq.s32.totalorder %v1445, %v286
      %vm1470 = vcmp.eq.s32.totalorder %v1448, %v286
      %vm1471 = vcmp.eq.s32.totalorder %v1451, %v286
      %vm1472 = vcmp.eq.s32.totalorder %v1454, %v286
      %vm1473 = vcmp.eq.s32.totalorder %v1457, %v286
      %v1474 = vsel %vm1458, 1.0, 0.0
      %v1475 = vsel %vm1459, 1.0, 0.0
      %v1476 = vsel %vm1460, 1.0, 0.0
      %v1477 = vsel %vm1461, 1.0, 0.0
      %v1478 = vsel %vm1462, 1.0, 0.0
      %v1479 = vsel %vm1463, 1.0, 0.0
      %v1480 = vsel %vm1464, 1.0, 0.0
      %v1481 = vsel %vm1465, 1.0, 0.0
      %v1482 = vsel %vm1466, 1.0, 0.0
      %v1483 = vsel %vm1467, 1.0, 0.0
      %v1484 = vsel %vm1468, 1.0, 0.0
      %v1485 = vsel %vm1469, 1.0, 0.0
      %v1486 = vsel %vm1470, 1.0, 0.0
      %v1487 = vsel %vm1471, 1.0, 0.0
      %v1488 = vsel %vm1472, 1.0, 0.0
      %v1489 = vsel %vm1473, 1.0, 0.0
      %v1490 = vpack.c.bf16 %v1475, %v1474
      %v1491 = vpack.c.bf16 %v1477, %v1476
      %v1492 = vpack.c.bf16 %v1479, %v1478
      %v1493 = vpack.c.bf16 %v1481, %v1480
      %v1494 = vpack.c.bf16 %v1483, %v1482
      %v1495 = vpack.c.bf16 %v1485, %v1484
      %v1496 = vpack.c.bf16 %v1487, %v1486
      %v1497 = vpack.c.bf16 %v1489, %v1488
      %v1499 = vsel %vm414, %v1490, 0
      %v1502 = vsel %vm414, %v1491, 0
      %v1505 = vsel %vm414, %v1492, 0
      %v1508 = vsel %vm414, %v1493, 0
      %v1511 = vsel %vm414, %v1494, 0
      %v1514 = vsel %vm414, %v1495, 0
      %v1517 = vsel %vm414, %v1496, 0
      %v1520 = vsel %vm414, %v1497, 0
      %1522 = vmatprep.subr.bf16.mxu0 0
      %1523 = vmatpush1.bf16.msra.mxu0 0
      %1524 = vmatprep.subr.bf16.mxu0 0
      %1525 = vmatpush1.bf16.msra.mxu0 %v441
      %1526 = vmatprep.subr.bf16.mxu0 0
      %1527 = vmatpush1.bf16.msra.mxu0 %v406
      %1528 = vmatprep.subr.bf16.mxu0 0
      %1529 = vmatpush1.bf16.msra.mxu0 %v405
      %1530 = vmatprep.subr.bf16.mxu0 0
      %1531 = vmatpush1.bf16.msra.mxu0 %v404
      %1532 = vmatprep.subr.bf16.mxu0 0
      %1533 = vmatpush1.bf16.msra.mxu0 %v403
      %1534 = vmatprep.subr.bf16.mxu0 0
      %1535 = vmatpush1.bf16.msra.mxu0 %v402
      %1536 = vmatprep.subr.bf16.mxu0 0
      %1537 = vmatpush1.bf16.msra.mxu0 %v401
      %1538 = vmatprep.subr.bf16.mxu0 0
      %1539 = vmatpush2.bf16.msra.mxu0 0
      %1540 = vmatprep.subr.bf16.mxu0 0
      %1541 = vmatpush2.bf16.msra.mxu0 0
      %1542 = vmatprep.subr.bf16.mxu0 0
      %1543 = vmatpush2.bf16.msra.mxu0 0
      %1544 = vmatprep.subr.bf16.mxu0 0
      %1545 = vmatpush2.bf16.msra.mxu0 0
      %1546 = vmatprep.subr.bf16.mxu0 0
      %1547 = vmatpush2.bf16.msra.mxu0 0
      %1548 = vmatprep.subr.bf16.mxu0 0
      %1549 = vmatpush2.bf16.msra.mxu0 0
      %1550 = vmatprep.subr.bf16.mxu0 0
      %1551 = vmatpush2.bf16.msra.mxu0 0
      %1552 = vmatprep.subr.bf16.mxu0 0
      %1553 = vmatpush2.bf16.msra.mxu0 0
      %1554 = vmatprep.mubr.bf16.mxu0 0
      %1555 = vmatmul.mubr.bf16.gmra.mxu0 %v1499
      %v1556 = vpop.f32.mrf.mxu0
      %v1557 = vadd.f32 0.0, %v1556
      %v1558 = vpop.f32.mrf.mxu0
      %v1559 = vpop.f32.mrf.mxu0
      %v1560 = vadd.f32 0.0, %v1559
      %v1561 = vpop.f32.mrf.mxu0
      %1562 = vmatprep.mubr.bf16.mxu0 0
      %1563 = vmatmul.mubr.bf16.gmra.mxu0 %v1502
      %v1564 = vpop.f32.mrf.mxu0
      %v1565 = vadd.f32 0.0, %v1564
      %v1566 = vpop.f32.mrf.mxu0
      %v1567 = vpop.f32.mrf.mxu0
      %v1568 = vadd.f32 0.0, %v1567
      %v1569 = vpop.f32.mrf.mxu0
      %1570 = vmatprep.mubr.bf16.mxu0 0
      %1571 = vmatmul.mubr.bf16.gmra.mxu0 %v1505
      %v1572 = vpop.f32.mrf.mxu0
      %v1573 = vadd.f32 0.0, %v1572
      %v1574 = vpop.f32.mrf.mxu0
      %v1575 = vpop.f32.mrf.mxu0
      %v1576 = vadd.f32 0.0, %v1575
      %v1577 = vpop.f32.mrf.mxu0
      %1578 = vmatprep.mubr.bf16.mxu0 0
      %1579 = vmatmul.mubr.bf16.gmra.mxu0 %v1508
      %v1580 = vpop.f32.mrf.mxu0
      %v1581 = vadd.f32 0.0, %v1580
      %v1582 = vpop.f32.mrf.mxu0
      %v1583 = vpop.f32.mrf.mxu0
      %v1584 = vadd.f32 0.0, %v1583
      %v1585 = vpop.f32.mrf.mxu0
      %1586 = vmatprep.mubr.bf16.mxu0 0
      %1587 = vmatmul.mubr.bf16.gmra.mxu0 %v1511
      %v1588 = vpop.f32.mrf.mxu0
      %v1589 = vadd.f32 0.0, %v1588
      %v1590 = vpop.f32.mrf.mxu0
      %v1591 = vpop.f32.mrf.mxu0
      %v1592 = vadd.f32 0.0, %v1591
      %v1593 = vpop.f32.mrf.mxu0
      %1594 = vmatprep.mubr.bf16.mxu0 0
      %1595 = vmatmul.mubr.bf16.gmra.mxu0 %v1514
      %v1596 = vpop.f32.mrf.mxu0
      %v1597 = vadd.f32 0.0, %v1596
      %v1598 = vpop.f32.mrf.mxu0
      %v1599 = vpop.f32.mrf.mxu0
      %v1600 = vadd.f32 0.0, %v1599
      %v1601 = vpop.f32.mrf.mxu0
      %1602 = vmatprep.mubr.bf16.mxu0 0
      %1603 = vmatmul.mubr.bf16.gmra.mxu0 %v1517
      %v1604 = vpop.f32.mrf.mxu0
      %v1605 = vadd.f32 0.0, %v1604
      %v1606 = vpop.f32.mrf.mxu0
      %v1607 = vpop.f32.mrf.mxu0
      %v1608 = vadd.f32 0.0, %v1607
      %v1609 = vpop.f32.mrf.mxu0
      %1610 = vmatprep.mubr.bf16.mxu0 0
      %1611 = vmatmul.mubr.bf16.gmra.mxu0 %v1520
      %v1612 = vpop.f32.mrf.mxu0
      %v1613 = vadd.f32 0.0, %v1612
      %v1614 = vpop.f32.mrf.mxu0
      %v1615 = vpop.f32.mrf.mxu0
      %v1616 = vadd.f32 0.0, %v1615
      %v1617 = vpop.f32.mrf.mxu0
      %1618 = vdwg.mxu0
      %v1619 = vpack.c.bf16 %v1560, %v1557
      %v1620 = vpack.c.bf16 %v1568, %v1565
      %v1621 = vpack.c.bf16 %v1576, %v1573
      %v1622 = vpack.c.bf16 %v1584, %v1581
      %v1623 = vpack.c.bf16 %v1592, %v1589
      %v1624 = vpack.c.bf16 %v1600, %v1597
      %v1625 = vpack.c.bf16 %v1608, %v1605
      %v1626 = vpack.c.bf16 %v1616, %v1613
      %v1627 = vld [vmem:[%s2 + $0x30] sm:$0xf]
      %v1628 = vld [vmem:[%s2 + $0x34] sm:$0xf]
      %v1629 = vld [vmem:[%s2 + $0x38] sm:$0xf]
      %v1630 = vld [vmem:[%s2 + $0x3c] sm:$0xf]
      %v1635 = vunpack.c.l.b16 %v1627
      %v1636 = vunpack.c.l.b16 %v1628
      %v1637 = vunpack.c.l.b16 %v1629
      %v1638 = vunpack.c.l.b16 %v1630
      %v1639 = vpack.c.b16 %v1636, %v1635
      %v1640 = vpack.c.b16 %v1638, %v1637
      %v1644 = vsel %vm785, %v1619, 0
      %v1647 = vsel %vm785, %v1620, 0
      %v1650 = vsel %vm785, %v1621, 0
      %v1653 = vsel %vm785, %v1622, 0
      %v1656 = vsel %vm785, %v1623, 0
      %v1659 = vsel %vm785, %v1624, 0
      %v1662 = vsel %vm785, %v1625, 0
      %v1665 = vsel %vm785, %v1626, 0
      %1667 = vmatprep.subr.bf16.mxu0 0
      %1668 = vmatpush1.bf16.msra.mxu0 0
      %1669 = vmatprep.subr.bf16.mxu0 0
      %1670 = vmatpush1.bf16.msra.mxu0 0
      %1671 = vmatprep.subr.bf16.mxu0 0
      %1672 = vmatpush1.bf16.msra.mxu0 0
      %1673 = vmatprep.subr.bf16.mxu0 0
      %1674 = vmatpush1.bf16.msra.mxu0 0
      %1675 = vmatprep.subr.bf16.mxu0 0
      %1676 = vmatpush1.bf16.msra.mxu0 0
      %1677 = vmatprep.subr.bf16.mxu0 0
      %1678 = vmatpush1.bf16.msra.mxu0 0
      %1679 = vmatprep.subr.bf16.mxu0 0
      %1680 = vmatpush1.bf16.msra.mxu0 %v1640
      %1681 = vmatprep.subr.bf16.mxu0 0
      %1682 = vmatpush1.bf16.msra.mxu0 %v1639
      %1683 = vmatprep.subr.bf16.mxu0 0
      %1684 = vmatpush2.bf16.msra.mxu0 0
      %1685 = vmatprep.subr.bf16.mxu0 0
      %1686 = vmatpush2.bf16.msra.mxu0 0
      %1687 = vmatprep.subr.bf16.mxu0 0
      %1688 = vmatpush2.bf16.msra.mxu0 0
      %1689 = vmatprep.subr.bf16.mxu0 0
      %1690 = vmatpush2.bf16.msra.mxu0 0
      %1691 = vmatprep.subr.bf16.mxu0 0
      %1692 = vmatpush2.bf16.msra.mxu0 0
      %1693 = vmatprep.subr.bf16.mxu0 0
      %1694 = vmatpush2.bf16.msra.mxu0 0
      %1695 = vmatprep.subr.bf16.mxu0 0
      %1696 = vmatpush2.bf16.msra.mxu0 0
      %1697 = vmatprep.subr.bf16.mxu0 0
      %1698 = vmatpush2.bf16.msra.mxu0 0
      %1699 = vmatprep.mubr.bf16.mxu0 0
      %1700 = vmatmul.mubr.bf16.gmra.mxu0 %v1644
      %v1701 = vpop.f32.mrf.mxu0
      %v1702 = vadd.f32 0.0, %v1701
      %v1703 = vpop.f32.mrf.mxu0
      %v1704 = vpop.f32.mrf.mxu0
      %v1705 = vadd.f32 0.0, %v1704
      %v1706 = vpop.f32.mrf.mxu0
      %1707 = vmatprep.mubr.bf16.mxu0 0
      %1708 = vmatmul.mubr.bf16.gmra.mxu0 %v1647
      %v1709 = vpop.f32.mrf.mxu0
      %v1710 = vadd.f32 0.0, %v1709
      %v1711 = vpop.f32.mrf.mxu0
      %v1712 = vpop.f32.mrf.mxu0
      %v1713 = vadd.f32 0.0, %v1712
      %v1714 = vpop.f32.mrf.mxu0
      %1715 = vmatprep.mubr.bf16.mxu0 0
      %1716 = vmatmul.mubr.bf16.gmra.mxu0 %v1650
      %v1717 = vpop.f32.mrf.mxu0
      %v1718 = vadd.f32 0.0, %v1717
      %v1719 = vpop.f32.mrf.mxu0
      %v1720 = vpop.f32.mrf.mxu0
      %v1721 = vadd.f32 0.0, %v1720
      %v1722 = vpop.f32.mrf.mxu0
      %1723 = vmatprep.mubr.bf16.mxu0 0
      %1724 = vmatmul.mubr.bf16.gmra.mxu0 %v1653
      %v1725 = vpop.f32.mrf.mxu0
      %v1726 = vadd.f32 0.0, %v1725
      %v1727 = vpop.f32.mrf.mxu0
      %v1728 = vpop.f32.mrf.mxu0
      %v1729 = vadd.f32 0.0, %v1728
      %v1730 = vpop.f32.mrf.mxu0
      %1731 = vmatprep.mubr.bf16.mxu0 0
      %1732 = vmatmul.mubr.bf16.gmra.mxu0 %v1656
      %v1733 = vpop.f32.mrf.mxu0
      %v1734 = vadd.f32 0.0, %v1733
      %v1735 = vpop.f32.mrf.mxu0
      %v1736 = vpop.f32.mrf.mxu0
      %v1737 = vadd.f32 0.0, %v1736
      %v1738 = vpop.f32.mrf.mxu0
      %1739 = vmatprep.mubr.bf16.mxu0 0
      %1740 = vmatmul.mubr.bf16.gmra.mxu0 %v1659
      %v1741 = vpop.f32.mrf.mxu0
      %v1742 = vadd.f32 0.0, %v1741
      %v1743 = vpop.f32.mrf.mxu0
      %v1744 = vpop.f32.mrf.mxu0
      %v1745 = vadd.f32 0.0, %v1744
      %v1746 = vpop.f32.mrf.mxu0
      %1747 = vmatprep.mubr.bf16.mxu0 0
      %1748 = vmatmul.mubr.bf16.gmra.mxu0 %v1662
      %v1749 = vpop.f32.mrf.mxu0
      %v1750 = vadd.f32 0.0, %v1749
      %v1751 = vpop.f32.mrf.mxu0
      %v1752 = vpop.f32.mrf.mxu0
      %v1753 = vadd.f32 0.0, %v1752
      %v1754 = vpop.f32.mrf.mxu0
      %1755 = vmatprep.mubr.bf16.mxu0 0
      %1756 = vmatmul.mubr.bf16.gmra.mxu0 %v1665
      %v1757 = vpop.f32.mrf.mxu0
      %v1758 = vadd.f32 0.0, %v1757
      %v1759 = vpop.f32.mrf.mxu0
      %v1760 = vpop.f32.mrf.mxu0
      %v1761 = vadd.f32 0.0, %v1760
      %v1762 = vpop.f32.mrf.mxu0
      %1763 = vdwg.mxu0
      %v1764 = vadd.f32 %v1394, %v1702
      %v1765 = vadd.f32 %v1395, %v1705
      %v1766 = vadd.f32 %v1396, %v1710
      %v1767 = vadd.f32 %v1397, %v1713
      %v1768 = vadd.f32 %v1398, %v1718
      %v1769 = vadd.f32 %v1399, %v1721
      %v1770 = vadd.f32 %v1400, %v1726
      %v1771 = vadd.f32 %v1401, %v1729
      %v1772 = vadd.f32 %v1402, %v1734
      %v1773 = vadd.f32 %v1403, %v1737
      %v1774 = vadd.f32 %v1404, %v1742
      %v1775 = vadd.f32 %v1405, %v1745
      %v1776 = vadd.f32 %v1406, %v1750
      %v1777 = vadd.f32 %v1407, %v1753
      %v1778 = vadd.f32 %v1408, %v1758
      %v1779 = vadd.f32 %v1409, %v1761
      %1780 = vset.pattern.permute.xlu0 4
      %1781 = vperm.xlu0 %1780, %v256
      %v1782 = vpop.permute.xlu0 %1781
      %1783 = vset.pattern.permute.xlu0 4
      %1784 = vperm.xlu0 %1783, %v257
      %v1785 = vpop.permute.xlu0 %1784
      %1786 = vset.pattern.permute.xlu0 4
      %1787 = vperm.xlu0 %1786, %v258
      %v1788 = vpop.permute.xlu0 %1787
      %1789 = vset.pattern.permute.xlu0 4
      %1790 = vperm.xlu0 %1789, %v259
      %v1791 = vpop.permute.xlu0 %1790
      %1792 = vset.pattern.permute.xlu0 4
      %1793 = vperm.xlu0 %1792, %v260
      %v1794 = vpop.permute.xlu0 %1793
      %1795 = vset.pattern.permute.xlu0 4
      %1796 = vperm.xlu0 %1795, %v261
      %v1797 = vpop.permute.xlu0 %1796
      %1798 = vset.pattern.permute.xlu0 4
      %1799 = vperm.xlu0 %1798, %v262
      %v1800 = vpop.permute.xlu0 %1799
      %1801 = vset.pattern.permute.xlu0 4
      %1802 = vperm.xlu0 %1801, %v263
      %v1803 = vpop.permute.xlu0 %1802
      %1804 = vset.pattern.permute.xlu0 4
      %1805 = vperm.xlu0 %1804, %v264
      %v1806 = vpop.permute.xlu0 %1805
      %1807 = vset.pattern.permute.xlu0 4
      %1808 = vperm.xlu0 %1807, %v265
      %v1809 = vpop.permute.xlu0 %1808
      %1810 = vset.pattern.permute.xlu0 4
      %1811 = vperm.xlu0 %1810, %v266
      %v1812 = vpop.permute.xlu0 %1811
      %1813 = vset.pattern.permute.xlu0 4
      %1814 = vperm.xlu0 %1813, %v267
      %v1815 = vpop.permute.xlu0 %1814
      %1816 = vset.pattern.permute.xlu0 4
      %1817 = vperm.xlu0 %1816, %v268
      %v1818 = vpop.permute.xlu0 %1817
      %1819 = vset.pattern.permute.xlu0 4
      %1820 = vperm.xlu0 %1819, %v269
      %v1821 = vpop.permute.xlu0 %1820
      %1822 = vset.pattern.permute.xlu0 4
      %1823 = vperm.xlu0 %1822, %v270
      %v1824 = vpop.permute.xlu0 %1823
      %1825 = vset.pattern.permute.xlu0 4
      %1826 = vperm.xlu0 %1825, %v271
      %v1827 = vpop.permute.xlu0 %1826
      %vm1828 = vcmp.eq.s32.totalorder %v1782, %v286
      %vm1829 = vcmp.eq.s32.totalorder %v1785, %v286
      %vm1830 = vcmp.eq.s32.totalorder %v1788, %v286
      %vm1831 = vcmp.eq.s32.totalorder %v1791, %v286
      %vm1832 = vcmp.eq.s32.totalorder %v1794, %v286
      %vm1833 = vcmp.eq.s32.totalorder %v1797, %v286
      %vm1834 = vcmp.eq.s32.totalorder %v1800, %v286
      %vm1835 = vcmp.eq.s32.totalorder %v1803, %v286
      %vm1836 = vcmp.eq.s32.totalorder %v1806, %v286
      %vm1837 = vcmp.eq.s32.totalorder %v1809, %v286
      %vm1838 = vcmp.eq.s32.totalorder %v1812, %v286
      %vm1839 = vcmp.eq.s32.totalorder %v1815, %v286
      %vm1840 = vcmp.eq.s32.totalorder %v1818, %v286
      %vm1841 = vcmp.eq.s32.totalorder %v1821, %v286
      %vm1842 = vcmp.eq.s32.totalorder %v1824, %v286
      %vm1843 = vcmp.eq.s32.totalorder %v1827, %v286
      %v1844 = vsel %vm1828, 1.0, 0.0
      %v1845 = vsel %vm1829, 1.0, 0.0
      %v1846 = vsel %vm1830, 1.0, 0.0
      %v1847 = vsel %vm1831, 1.0, 0.0
      %v1848 = vsel %vm1832, 1.0, 0.0
      %v1849 = vsel %vm1833, 1.0, 0.0
      %v1850 = vsel %vm1834, 1.0, 0.0
      %v1851 = vsel %vm1835, 1.0, 0.0
      %v1852 = vsel %vm1836, 1.0, 0.0
      %v1853 = vsel %vm1837, 1.0, 0.0
      %v1854 = vsel %vm1838, 1.0, 0.0
      %v1855 = vsel %vm1839, 1.0, 0.0
      %v1856 = vsel %vm1840, 1.0, 0.0
      %v1857 = vsel %vm1841, 1.0, 0.0
      %v1858 = vsel %vm1842, 1.0, 0.0
      %v1859 = vsel %vm1843, 1.0, 0.0
      %v1860 = vpack.c.bf16 %v1845, %v1844
      %v1861 = vpack.c.bf16 %v1847, %v1846
      %v1862 = vpack.c.bf16 %v1849, %v1848
      %v1863 = vpack.c.bf16 %v1851, %v1850
      %v1864 = vpack.c.bf16 %v1853, %v1852
      %v1865 = vpack.c.bf16 %v1855, %v1854
      %v1866 = vpack.c.bf16 %v1857, %v1856
      %v1867 = vpack.c.bf16 %v1859, %v1858
      %v1869 = vsel %vm414, %v1860, 0
      %v1872 = vsel %vm414, %v1861, 0
      %v1875 = vsel %vm414, %v1862, 0
      %v1878 = vsel %vm414, %v1863, 0
      %v1881 = vsel %vm414, %v1864, 0
      %v1884 = vsel %vm414, %v1865, 0
      %v1887 = vsel %vm414, %v1866, 0
      %v1890 = vsel %vm414, %v1867, 0
      %1892 = vmatprep.subr.bf16.mxu0 0
      %1893 = vmatpush1.bf16.msra.mxu0 0
      %1894 = vmatprep.subr.bf16.mxu0 0
      %1895 = vmatpush1.bf16.msra.mxu0 %v441
      %1896 = vmatprep.subr.bf16.mxu0 0
      %1897 = vmatpush1.bf16.msra.mxu0 %v406
      %1898 = vmatprep.subr.bf16.mxu0 0
      %1899 = vmatpush1.bf16.msra.mxu0 %v405
      %1900 = vmatprep.subr.bf16.mxu0 0
      %1901 = vmatpush1.bf16.msra.mxu0 %v404
      %1902 = vmatprep.subr.bf16.mxu0 0
      %1903 = vmatpush1.bf16.msra.mxu0 %v403
      %1904 = vmatprep.subr.bf16.mxu0 0
      %1905 = vmatpush1.bf16.msra.mxu0 %v402
      %1906 = vmatprep.subr.bf16.mxu0 0
      %1907 = vmatpush1.bf16.msra.mxu0 %v401
      %1908 = vmatprep.subr.bf16.mxu0 0
      %1909 = vmatpush2.bf16.msra.mxu0 0
      %1910 = vmatprep.subr.bf16.mxu0 0
      %1911 = vmatpush2.bf16.msra.mxu0 0
      %1912 = vmatprep.subr.bf16.mxu0 0
      %1913 = vmatpush2.bf16.msra.mxu0 0
      %1914 = vmatprep.subr.bf16.mxu0 0
      %1915 = vmatpush2.bf16.msra.mxu0 0
      %1916 = vmatprep.subr.bf16.mxu0 0
      %1917 = vmatpush2.bf16.msra.mxu0 0
      %1918 = vmatprep.subr.bf16.mxu0 0
      %1919 = vmatpush2.bf16.msra.mxu0 0
      %1920 = vmatprep.subr.bf16.mxu0 0
      %1921 = vmatpush2.bf16.msra.mxu0 0
      %1922 = vmatprep.subr.bf16.mxu0 0
      %1923 = vmatpush2.bf16.msra.mxu0 0
      %1924 = vmatprep.mubr.bf16.mxu0 0
      %1925 = vmatmul.mubr.bf16.gmra.mxu0 %v1869
      %v1926 = vpop.f32.mrf.mxu0
      %v1927 = vadd.f32 0.0, %v1926
      %v1928 = vpop.f32.mrf.mxu0
      %v1929 = vpop.f32.mrf.mxu0
      %v1930 = vadd.f32 0.0, %v1929
      %v1931 = vpop.f32.mrf.mxu0
      %1932 = vmatprep.mubr.bf16.mxu0 0
      %1933 = vmatmul.mubr.bf16.gmra.mxu0 %v1872
      %v1934 = vpop.f32.mrf.mxu0
      %v1935 = vadd.f32 0.0, %v1934
      %v1936 = vpop.f32.mrf.mxu0
      %v1937 = vpop.f32.mrf.mxu0
      %v1938 = vadd.f32 0.0, %v1937
      %v1939 = vpop.f32.mrf.mxu0
      %1940 = vmatprep.mubr.bf16.mxu0 0
      %1941 = vmatmul.mubr.bf16.gmra.mxu0 %v1875
      %v1942 = vpop.f32.mrf.mxu0
      %v1943 = vadd.f32 0.0, %v1942
      %v1944 = vpop.f32.mrf.mxu0
      %v1945 = vpop.f32.mrf.mxu0
      %v1946 = vadd.f32 0.0, %v1945
      %v1947 = vpop.f32.mrf.mxu0
      %1948 = vmatprep.mubr.bf16.mxu0 0
      %1949 = vmatmul.mubr.bf16.gmra.mxu0 %v1878
      %v1950 = vpop.f32.mrf.mxu0
      %v1951 = vadd.f32 0.0, %v1950
      %v1952 = vpop.f32.mrf.mxu0
      %v1953 = vpop.f32.mrf.mxu0
      %v1954 = vadd.f32 0.0, %v1953
      %v1955 = vpop.f32.mrf.mxu0
      %1956 = vmatprep.mubr.bf16.mxu0 0
      %1957 = vmatmul.mubr.bf16.gmra.mxu0 %v1881
      %v1958 = vpop.f32.mrf.mxu0
      %v1959 = vadd.f32 0.0, %v1958
      %v1960 = vpop.f32.mrf.mxu0
      %v1961 = vpop.f32.mrf.mxu0
      %v1962 = vadd.f32 0.0, %v1961
      %v1963 = vpop.f32.mrf.mxu0
      %1964 = vmatprep.mubr.bf16.mxu0 0
      %1965 = vmatmul.mubr.bf16.gmra.mxu0 %v1884
      %v1966 = vpop.f32.mrf.mxu0
      %v1967 = vadd.f32 0.0, %v1966
      %v1968 = vpop.f32.mrf.mxu0
      %v1969 = vpop.f32.mrf.mxu0
      %v1970 = vadd.f32 0.0, %v1969
      %v1971 = vpop.f32.mrf.mxu0
      %1972 = vmatprep.mubr.bf16.mxu0 0
      %1973 = vmatmul.mubr.bf16.gmra.mxu0 %v1887
      %v1974 = vpop.f32.mrf.mxu0
      %v1975 = vadd.f32 0.0, %v1974
      %v1976 = vpop.f32.mrf.mxu0
      %v1977 = vpop.f32.mrf.mxu0
      %v1978 = vadd.f32 0.0, %v1977
      %v1979 = vpop.f32.mrf.mxu0
      %1980 = vmatprep.mubr.bf16.mxu0 0
      %1981 = vmatmul.mubr.bf16.gmra.mxu0 %v1890
      %v1982 = vpop.f32.mrf.mxu0
      %v1983 = vadd.f32 0.0, %v1982
      %v1984 = vpop.f32.mrf.mxu0
      %v1985 = vpop.f32.mrf.mxu0
      %v1986 = vadd.f32 0.0, %v1985
      %v1987 = vpop.f32.mrf.mxu0
      %1988 = vdwg.mxu0
      %v1989 = vpack.c.bf16 %v1930, %v1927
      %v1990 = vpack.c.bf16 %v1938, %v1935
      %v1991 = vpack.c.bf16 %v1946, %v1943
      %v1992 = vpack.c.bf16 %v1954, %v1951
      %v1993 = vpack.c.bf16 %v1962, %v1959
      %v1994 = vpack.c.bf16 %v1970, %v1967
      %v1995 = vpack.c.bf16 %v1978, %v1975
      %v1996 = vpack.c.bf16 %v1986, %v1983
      %v1997 = vld [vmem:[%s2 + $0x40] sm:$0xf]
      %v1998 = vld [vmem:[%s2 + $0x44] sm:$0xf]
      %v1999 = vld [vmem:[%s2 + $0x48] sm:$0xf]
      %v2000 = vld [vmem:[%s2 + $0x4c] sm:$0xf]
      %v2005 = vunpack.c.l.b16 %v1997
      %v2006 = vunpack.c.l.b16 %v1998
      %v2007 = vunpack.c.l.b16 %v1999
      %v2008 = vunpack.c.l.b16 %v2000
      %v2009 = vpack.c.b16 %v2006, %v2005
      %v2010 = vpack.c.b16 %v2008, %v2007
      %v2014 = vsel %vm785, %v1989, 0
      %v2017 = vsel %vm785, %v1990, 0
      %v2020 = vsel %vm785, %v1991, 0
      %v2023 = vsel %vm785, %v1992, 0
      %v2026 = vsel %vm785, %v1993, 0
      %v2029 = vsel %vm785, %v1994, 0
      %v2032 = vsel %vm785, %v1995, 0
      %v2035 = vsel %vm785, %v1996, 0
      %2037 = vmatprep.subr.bf16.mxu0 0
      %2038 = vmatpush1.bf16.msra.mxu0 0
      %2039 = vmatprep.subr.bf16.mxu0 0
      %2040 = vmatpush1.bf16.msra.mxu0 0
      %2041 = vmatprep.subr.bf16.mxu0 0
      %2042 = vmatpush1.bf16.msra.mxu0 0
      %2043 = vmatprep.subr.bf16.mxu0 0
      %2044 = vmatpush1.bf16.msra.mxu0 0
      %2045 = vmatprep.subr.bf16.mxu0 0
      %2046 = vmatpush1.bf16.msra.mxu0 0
      %2047 = vmatprep.subr.bf16.mxu0 0
      %2048 = vmatpush1.bf16.msra.mxu0 0
      %2049 = vmatprep.subr.bf16.mxu0 0
      %2050 = vmatpush1.bf16.msra.mxu0 %v2010
      %2051 = vmatprep.subr.bf16.mxu0 0
      %2052 = vmatpush1.bf16.msra.mxu0 %v2009
      %2053 = vmatprep.subr.bf16.mxu0 0
      %2054 = vmatpush2.bf16.msra.mxu0 0
      %2055 = vmatprep.subr.bf16.mxu0 0
      %2056 = vmatpush2.bf16.msra.mxu0 0
      %2057 = vmatprep.subr.bf16.mxu0 0
      %2058 = vmatpush2.bf16.msra.mxu0 0
      %2059 = vmatprep.subr.bf16.mxu0 0
      %2060 = vmatpush2.bf16.msra.mxu0 0
      %2061 = vmatprep.subr.bf16.mxu0 0
      %2062 = vmatpush2.bf16.msra.mxu0 0
      %2063 = vmatprep.subr.bf16.mxu0 0
      %2064 = vmatpush2.bf16.msra.mxu0 0
      %2065 = vmatprep.subr.bf16.mxu0 0
      %2066 = vmatpush2.bf16.msra.mxu0 0
      %2067 = vmatprep.subr.bf16.mxu0 0
      %2068 = vmatpush2.bf16.msra.mxu0 0
      %2069 = vmatprep.mubr.bf16.mxu0 0
      %2070 = vmatmul.mubr.bf16.gmra.mxu0 %v2014
      %v2071 = vpop.f32.mrf.mxu0
      %v2072 = vadd.f32 0.0, %v2071
      %v2073 = vpop.f32.mrf.mxu0
      %v2074 = vpop.f32.mrf.mxu0
      %v2075 = vadd.f32 0.0, %v2074
      %v2076 = vpop.f32.mrf.mxu0
      %2077 = vmatprep.mubr.bf16.mxu0 0
      %2078 = vmatmul.mubr.bf16.gmra.mxu0 %v2017
      %v2079 = vpop.f32.mrf.mxu0
      %v2080 = vadd.f32 0.0, %v2079
      %v2081 = vpop.f32.mrf.mxu0
      %v2082 = vpop.f32.mrf.mxu0
      %v2083 = vadd.f32 0.0, %v2082
      %v2084 = vpop.f32.mrf.mxu0
      %2085 = vmatprep.mubr.bf16.mxu0 0
      %2086 = vmatmul.mubr.bf16.gmra.mxu0 %v2020
      %v2087 = vpop.f32.mrf.mxu0
      %v2088 = vadd.f32 0.0, %v2087
      %v2089 = vpop.f32.mrf.mxu0
      %v2090 = vpop.f32.mrf.mxu0
      %v2091 = vadd.f32 0.0, %v2090
      %v2092 = vpop.f32.mrf.mxu0
      %2093 = vmatprep.mubr.bf16.mxu0 0
      %2094 = vmatmul.mubr.bf16.gmra.mxu0 %v2023
      %v2095 = vpop.f32.mrf.mxu0
      %v2096 = vadd.f32 0.0, %v2095
      %v2097 = vpop.f32.mrf.mxu0
      %v2098 = vpop.f32.mrf.mxu0
      %v2099 = vadd.f32 0.0, %v2098
      %v2100 = vpop.f32.mrf.mxu0
      %2101 = vmatprep.mubr.bf16.mxu0 0
      %2102 = vmatmul.mubr.bf16.gmra.mxu0 %v2026
      %v2103 = vpop.f32.mrf.mxu0
      %v2104 = vadd.f32 0.0, %v2103
      %v2105 = vpop.f32.mrf.mxu0
      %v2106 = vpop.f32.mrf.mxu0
      %v2107 = vadd.f32 0.0, %v2106
      %v2108 = vpop.f32.mrf.mxu0
      %2109 = vmatprep.mubr.bf16.mxu0 0
      %2110 = vmatmul.mubr.bf16.gmra.mxu0 %v2029
      %v2111 = vpop.f32.mrf.mxu0
      %v2112 = vadd.f32 0.0, %v2111
      %v2113 = vpop.f32.mrf.mxu0
      %v2114 = vpop.f32.mrf.mxu0
      %v2115 = vadd.f32 0.0, %v2114
      %v2116 = vpop.f32.mrf.mxu0
      %2117 = vmatprep.mubr.bf16.mxu0 0
      %2118 = vmatmul.mubr.bf16.gmra.mxu0 %v2032
      %v2119 = vpop.f32.mrf.mxu0
      %v2120 = vadd.f32 0.0, %v2119
      %v2121 = vpop.f32.mrf.mxu0
      %v2122 = vpop.f32.mrf.mxu0
      %v2123 = vadd.f32 0.0, %v2122
      %v2124 = vpop.f32.mrf.mxu0
      %2125 = vmatprep.mubr.bf16.mxu0 0
      %2126 = vmatmul.mubr.bf16.gmra.mxu0 %v2035
      %v2127 = vpop.f32.mrf.mxu0
      %v2128 = vadd.f32 0.0, %v2127
      %v2129 = vpop.f32.mrf.mxu0
      %v2130 = vpop.f32.mrf.mxu0
      %v2131 = vadd.f32 0.0, %v2130
      %v2132 = vpop.f32.mrf.mxu0
      %2133 = vdwg.mxu0
      %v2134 = vadd.f32 %v1764, %v2072
      %v2135 = vadd.f32 %v1765, %v2075
      %v2136 = vadd.f32 %v1766, %v2080
      %v2137 = vadd.f32 %v1767, %v2083
      %v2138 = vadd.f32 %v1768, %v2088
      %v2139 = vadd.f32 %v1769, %v2091
      %v2140 = vadd.f32 %v1770, %v2096
      %v2141 = vadd.f32 %v1771, %v2099
      %v2142 = vadd.f32 %v1772, %v2104
      %v2143 = vadd.f32 %v1773, %v2107
      %v2144 = vadd.f32 %v1774, %v2112
      %v2145 = vadd.f32 %v1775, %v2115
      %v2146 = vadd.f32 %v1776, %v2120
      %v2147 = vadd.f32 %v1777, %v2123
      %v2148 = vadd.f32 %v1778, %v2128
      %v2149 = vadd.f32 %v1779, %v2131
      %v2150 = vld [vmem:[%s3] sm:$0x1]
      %v2152 = vlaneseq
      %v2153 = vshrl.u32 %v2152, 7
      %v2154 = vsub.s32 0, %v2153
      %v2155 = vrot.slane %v2150, %v2154
      %v2157 = vadd.f32 %v2134, %v2155
      %v2158 = vadd.f32 %v2135, %v2155
      %v2159 = vadd.f32 %v2136, %v2155
      %v2160 = vadd.f32 %v2137, %v2155
      %v2161 = vadd.f32 %v2138, %v2155
      %v2162 = vadd.f32 %v2139, %v2155
      %v2163 = vadd.f32 %v2140, %v2155
      %v2164 = vadd.f32 %v2141, %v2155
      %v2165 = vadd.f32 %v2142, %v2155
      %v2166 = vadd.f32 %v2143, %v2155
      %v2167 = vadd.f32 %v2144, %v2155
      %v2168 = vadd.f32 %v2145, %v2155
      %v2169 = vadd.f32 %v2146, %v2155
      %v2170 = vadd.f32 %v2147, %v2155
      %v2171 = vadd.f32 %v2148, %v2155
      %v2172 = vadd.f32 %v2149, %v2155
      %v2173 = vtanh.pop %v2157
      %v2174 = vtanh.pop %v2158
      %v2175 = vtanh.pop %v2159
      %v2176 = vtanh.pop %v2160
      %v2177 = vtanh.pop %v2161
      %v2178 = vtanh.pop %v2162
      %v2179 = vtanh.pop %v2163
      %v2180 = vtanh.pop %v2164
      %v2181 = vtanh.pop %v2165
      %v2182 = vtanh.pop %v2166
      %v2183 = vtanh.pop %v2167
      %v2184 = vtanh.pop %v2168
      %v2185 = vtanh.pop %v2169
      %v2186 = vtanh.pop %v2170
      %v2187 = vtanh.pop %v2171
      %v2188 = vtanh.pop %v2172
      %v2189 = vpack.c.bf16 %v2174, %v2173
      %v2190 = vpack.c.bf16 %v2176, %v2175
      %v2191 = vpack.c.bf16 %v2178, %v2177
      %v2192 = vpack.c.bf16 %v2180, %v2179
      %v2193 = vpack.c.bf16 %v2182, %v2181
      %v2194 = vpack.c.bf16 %v2184, %v2183
      %v2195 = vpack.c.bf16 %v2186, %v2185
      %v2196 = vpack.c.bf16 %v2188, %v2187
      %v2197 = vld [vmem:[%s4] sm:$0xf]
      %v2198 = vld [vmem:[%s4 + $0x4] sm:$0xf]
      %v2199 = vld [vmem:[%s4 + $0x8] sm:$0xf]
      %v2200 = vld [vmem:[%s4 + $0xc] sm:$0xf]
      %v2201 = vld [vmem:[%s4 + $0x10] sm:$0xf]
      %v2202 = vld [vmem:[%s4 + $0x14] sm:$0xf]
      %v2203 = vld [vmem:[%s4 + $0x18] sm:$0xf]
      %v2204 = vld [vmem:[%s4 + $0x1c] sm:$0xf]
      %v2205 = vld [vmem:[%s5] sm:$0x1]
      %v2207 = vlaneseq
      %v2208 = vshrl.u32 %v2207, 7
      %v2209 = vsub.s32 0, %v2208
      %v2210 = vrot.slane %v2205, %v2209
      %v2220 = vunpack.c.l.b16 %v2197
      %v2221 = vunpack.c.l.b16 %v2198
      %v2222 = vunpack.c.l.b16 %v2199
      %v2223 = vunpack.c.l.b16 %v2200
      %v2224 = vunpack.c.l.b16 %v2201
      %v2225 = vunpack.c.l.b16 %v2202
      %v2226 = vunpack.c.l.b16 %v2203
      %v2227 = vunpack.c.l.b16 %v2204
      %v2228 = vpack.c.b16 %v2221, %v2220
      %v2229 = vpack.c.b16 %v2223, %v2222
      %v2230 = vpack.c.b16 %v2225, %v2224
      %v2231 = vpack.c.b16 %v2227, %v2226
      %vm2236 = vcmask 523264
      %v2238 = vsel %vm2236, %v2189, 0
      %v2241 = vsel %vm2236, %v2190, 0
      %v2244 = vsel %vm2236, %v2191, 0
      %v2247 = vsel %vm2236, %v2192, 0
      %v2250 = vsel %vm2236, %v2193, 0
      %v2253 = vsel %vm2236, %v2194, 0
      %v2256 = vsel %vm2236, %v2195, 0
      %v2259 = vsel %vm2236, %v2196, 0
      %2261 = vmatprep.subr.bf16.mxu0 0
      %2262 = vmatpush1.bf16.msra.mxu0 0
      %2263 = vmatprep.subr.bf16.mxu0 0
      %2264 = vmatpush1.bf16.msra.mxu0 0
      %2265 = vmatprep.subr.bf16.mxu0 0
      %2266 = vmatpush1.bf16.msra.mxu0 0
      %2267 = vmatprep.subr.bf16.mxu0 0
      %2268 = vmatpush1.bf16.msra.mxu0 0
      %2269 = vmatprep.subr.bf16.mxu0 0
      %2270 = vmatpush1.bf16.msra.mxu0 %v2231
      %2271 = vmatprep.subr.bf16.mxu0 0
      %2272 = vmatpush1.bf16.msra.mxu0 %v2230
      %2273 = vmatprep.subr.bf16.mxu0 0
      %2274 = vmatpush1.bf16.msra.mxu0 %v2229
      %2275 = vmatprep.subr.bf16.mxu0 0
      %2276 = vmatpush1.bf16.msra.mxu0 %v2228
      %2277 = vmatprep.subr.bf16.mxu0 0
      %2278 = vmatpush2.bf16.msra.mxu0 0
      %2279 = vmatprep.subr.bf16.mxu0 0
      %2280 = vmatpush2.bf16.msra.mxu0 0
      %2281 = vmatprep.subr.bf16.mxu0 0
      %2282 = vmatpush2.bf16.msra.mxu0 0
      %2283 = vmatprep.subr.bf16.mxu0 0
      %2284 = vmatpush2.bf16.msra.mxu0 0
      %2285 = vmatprep.subr.bf16.mxu0 0
      %2286 = vmatpush2.bf16.msra.mxu0 0
      %2287 = vmatprep.subr.bf16.mxu0 0
      %2288 = vmatpush2.bf16.msra.mxu0 0
      %2289 = vmatprep.subr.bf16.mxu0 0
      %2290 = vmatpush2.bf16.msra.mxu0 0
      %2291 = vmatprep.subr.bf16.mxu0 0
      %2292 = vmatpush2.bf16.msra.mxu0 0
      %2293 = vmatprep.mubr.bf16.mxu0 0
      %2294 = vmatmul.mubr.bf16.gmra.mxu0 %v2238
      %v2295 = vpop.f32.mrf.mxu0
      %v2296 = vadd.f32 %v2210, %v2295
      %v2297 = vpop.f32.mrf.mxu0
      %v2298 = vpop.f32.mrf.mxu0
      %v2299 = vadd.f32 %v2210, %v2298
      %v2300 = vpop.f32.mrf.mxu0
      %2301 = vmatprep.mubr.bf16.mxu0 0
      %2302 = vmatmul.mubr.bf16.gmra.mxu0 %v2241
      %v2303 = vpop.f32.mrf.mxu0
      %v2304 = vadd.f32 %v2210, %v2303
      %v2305 = vpop.f32.mrf.mxu0
      %v2306 = vpop.f32.mrf.mxu0
      %v2307 = vadd.f32 %v2210, %v2306
      %v2308 = vpop.f32.mrf.mxu0
      %2309 = vmatprep.mubr.bf16.mxu0 0
      %2310 = vmatmul.mubr.bf16.gmra.mxu0 %v2244
      %v2311 = vpop.f32.mrf.mxu0
      %v2312 = vadd.f32 %v2210, %v2311
      %v2313 = vpop.f32.mrf.mxu0
      %v2314 = vpop.f32.mrf.mxu0
      %v2315 = vadd.f32 %v2210, %v2314
      %v2316 = vpop.f32.mrf.mxu0
      %2317 = vmatprep.mubr.bf16.mxu0 0
      %2318 = vmatmul.mubr.bf16.gmra.mxu0 %v2247
      %v2319 = vpop.f32.mrf.mxu0
      %v2320 = vadd.f32 %v2210, %v2319
      %v2321 = vpop.f32.mrf.mxu0
      %v2322 = vpop.f32.mrf.mxu0
      %v2323 = vadd.f32 %v2210, %v2322
      %v2324 = vpop.f32.mrf.mxu0
      %2325 = vmatprep.mubr.bf16.mxu0 0
      %2326 = vmatmul.mubr.bf16.gmra.mxu0 %v2250
      %v2327 = vpop.f32.mrf.mxu0
      %v2328 = vadd.f32 %v2210, %v2327
      %v2329 = vpop.f32.mrf.mxu0
      %v2330 = vpop.f32.mrf.mxu0
      %v2331 = vadd.f32 %v2210, %v2330
      %v2332 = vpop.f32.mrf.mxu0
      %2333 = vmatprep.mubr.bf16.mxu0 0
      %2334 = vmatmul.mubr.bf16.gmra.mxu0 %v2253
      %v2335 = vpop.f32.mrf.mxu0
      %v2336 = vadd.f32 %v2210, %v2335
      %v2337 = vpop.f32.mrf.mxu0
      %v2338 = vpop.f32.mrf.mxu0
      %v2339 = vadd.f32 %v2210, %v2338
      %v2340 = vpop.f32.mrf.mxu0
      %2341 = vmatprep.mubr.bf16.mxu0 0
      %2342 = vmatmul.mubr.bf16.gmra.mxu0 %v2256
      %v2343 = vpop.f32.mrf.mxu0
      %v2344 = vadd.f32 %v2210, %v2343
      %v2345 = vpop.f32.mrf.mxu0
      %v2346 = vpop.f32.mrf.mxu0
      %v2347 = vadd.f32 %v2210, %v2346
      %v2348 = vpop.f32.mrf.mxu0
      %2349 = vmatprep.mubr.bf16.mxu0 0
      %2350 = vmatmul.mubr.bf16.gmra.mxu0 %v2259
      %v2351 = vpop.f32.mrf.mxu0
      %v2352 = vadd.f32 %v2210, %v2351
      %v2353 = vpop.f32.mrf.mxu0
      %v2354 = vpop.f32.mrf.mxu0
      %v2355 = vadd.f32 %v2210, %v2354
      %v2356 = vpop.f32.mrf.mxu0
      %2357 = vdwg.mxu0
      %vm2358 = vcmask 130048
      %v2359 = vsel %vm2358, %v2296, -inf
      %2360 = vmax.xlane.f32.xlu0 %v2359
      %v2361 = vpop.xlane.xlu0 %2360
      %v2362 = vsel %vm2358, %v2299, -inf
      %2363 = vmax.xlane.f32.xlu0 %v2362
      %v2364 = vpop.xlane.xlu0 %2363
      %v2365 = vsel %vm2358, %v2304, -inf
      %2366 = vmax.xlane.f32.xlu0 %v2365
      %v2367 = vpop.xlane.xlu0 %2366
      %v2368 = vsel %vm2358, %v2307, -inf
      %2369 = vmax.xlane.f32.xlu0 %v2368
      %v2370 = vpop.xlane.xlu0 %2369
      %v2371 = vsel %vm2358, %v2312, -inf
      %2372 = vmax.xlane.f32.xlu0 %v2371
      %v2373 = vpop.xlane.xlu0 %2372
      %v2374 = vsel %vm2358, %v2315, -inf
      %2375 = vmax.xlane.f32.xlu0 %v2374
      %v2376 = vpop.xlane.xlu0 %2375
      %v2377 = vsel %vm2358, %v2320, -inf
      %2378 = vmax.xlane.f32.xlu0 %v2377
      %v2379 = vpop.xlane.xlu0 %2378
      %v2380 = vsel %vm2358, %v2323, -inf
      %2381 = vmax.xlane.f32.xlu0 %v2380
      %v2382 = vpop.xlane.xlu0 %2381
      %v2383 = vsel %vm2358, %v2328, -inf
      %2384 = vmax.xlane.f32.xlu0 %v2383
      %v2385 = vpop.xlane.xlu0 %2384
      %v2386 = vsel %vm2358, %v2331, -inf
      %2387 = vmax.xlane.f32.xlu0 %v2386
      %v2388 = vpop.xlane.xlu0 %2387
      %v2389 = vsel %vm2358, %v2336, -inf
      %2390 = vmax.xlane.f32.xlu0 %v2389
      %v2391 = vpop.xlane.xlu0 %2390
      %v2392 = vsel %vm2358, %v2339, -inf
      %2393 = vmax.xlane.f32.xlu0 %v2392
      %v2394 = vpop.xlane.xlu0 %2393
      %v2395 = vsel %vm2358, %v2344, -inf
      %2396 = vmax.xlane.f32.xlu0 %v2395
      %v2397 = vpop.xlane.xlu0 %2396
      %v2398 = vsel %vm2358, %v2347, -inf
      %2399 = vmax.xlane.f32.xlu0 %v2398
      %v2400 = vpop.xlane.xlu0 %2399
      %v2401 = vsel %vm2358, %v2352, -inf
      %2402 = vmax.xlane.f32.xlu0 %v2401
      %v2403 = vpop.xlane.xlu0 %2402
      %v2404 = vsel %vm2358, %v2355, -inf
      %2405 = vmax.xlane.f32.xlu0 %v2404
      %v2406 = vpop.xlane.xlu0 %2405
      %v2407 = vsub.f32 %v2296, %v2361
      %v2408 = vsub.f32 %v2299, %v2364
      %v2409 = vsub.f32 %v2304, %v2367
      %v2410 = vsub.f32 %v2307, %v2370
      %v2411 = vsub.f32 %v2312, %v2373
      %v2412 = vsub.f32 %v2315, %v2376
      %v2413 = vsub.f32 %v2320, %v2379
      %v2414 = vsub.f32 %v2323, %v2382
      %v2415 = vsub.f32 %v2328, %v2385
      %v2416 = vsub.f32 %v2331, %v2388
      %v2417 = vsub.f32 %v2336, %v2391
      %v2418 = vsub.f32 %v2339, %v2394
      %v2419 = vsub.f32 %v2344, %v2397
      %v2420 = vsub.f32 %v2347, %v2400
      %v2421 = vsub.f32 %v2352, %v2403
      %v2422 = vsub.f32 %v2355, %v2406
      %v2423 = vmul.f32 %v2407, 1.442695
      %v2424 = vpow.pop %v2423
      %v2425 = vmul.f32 %v2408, 1.442695
      %v2426 = vpow.pop %v2425
      %v2427 = vmul.f32 %v2409, 1.442695
      %v2428 = vpow.pop %v2427
      %v2429 = vmul.f32 %v2410, 1.442695
      %v2430 = vpow.pop %v2429
      %v2431 = vmul.f32 %v2411, 1.442695
      %v2432 = vpow.pop %v2431
      %v2433 = vmul.f32 %v2412, 1.442695
      %v2434 = vpow.pop %v2433
      %v2435 = vmul.f32 %v2413, 1.442695
      %v2436 = vpow.pop %v2435
      %v2437 = vmul.f32 %v2414, 1.442695
      %v2438 = vpow.pop %v2437
      %v2439 = vmul.f32 %v2415, 1.442695
      %v2440 = vpow.pop %v2439
      %v2441 = vmul.f32 %v2416, 1.442695
      %v2442 = vpow.pop %v2441
      %v2443 = vmul.f32 %v2417, 1.442695
      %v2444 = vpow.pop %v2443
      %v2445 = vmul.f32 %v2418, 1.442695
      %v2446 = vpow.pop %v2445
      %v2447 = vmul.f32 %v2419, 1.442695
      %v2448 = vpow.pop %v2447
      %v2449 = vmul.f32 %v2420, 1.442695
      %v2450 = vpow.pop %v2449
      %v2451 = vmul.f32 %v2421, 1.442695
      %v2452 = vpow.pop %v2451
      %v2453 = vmul.f32 %v2422, 1.442695
      %v2454 = vpow.pop %v2453
      %v2455 = vsel %vm2358, %v2424, 0.0
      %2456 = vadd.xlane.f32.xlu0 %v2455
      %v2457 = vpop.xlane.xlu0 %2456
      %v2458 = vsel %vm2358, %v2426, 0.0
      %2459 = vadd.xlane.f32.xlu0 %v2458
      %v2460 = vpop.xlane.xlu0 %2459
      %v2461 = vsel %vm2358, %v2428, 0.0
      %2462 = vadd.xlane.f32.xlu0 %v2461
      %v2463 = vpop.xlane.xlu0 %2462
      %v2464 = vsel %vm2358, %v2430, 0.0
      %2465 = vadd.xlane.f32.xlu0 %v2464
      %v2466 = vpop.xlane.xlu0 %2465
      %v2467 = vsel %vm2358, %v2432, 0.0
      %2468 = vadd.xlane.f32.xlu0 %v2467
      %v2469 = vpop.xlane.xlu0 %2468
      %v2470 = vsel %vm2358, %v2434, 0.0
      %2471 = vadd.xlane.f32.xlu0 %v2470
      %v2472 = vpop.xlane.xlu0 %2471
      %v2473 = vsel %vm2358, %v2436, 0.0
      %2474 = vadd.xlane.f32.xlu0 %v2473
      %v2475 = vpop.xlane.xlu0 %2474
      %v2476 = vsel %vm2358, %v2438, 0.0
      %2477 = vadd.xlane.f32.xlu0 %v2476
      %v2478 = vpop.xlane.xlu0 %2477
      %v2479 = vsel %vm2358, %v2440, 0.0
      %2480 = vadd.xlane.f32.xlu0 %v2479
      %v2481 = vpop.xlane.xlu0 %2480
      %v2482 = vsel %vm2358, %v2442, 0.0
      %2483 = vadd.xlane.f32.xlu0 %v2482
      %v2484 = vpop.xlane.xlu0 %2483
      %v2485 = vsel %vm2358, %v2444, 0.0
      %2486 = vadd.xlane.f32.xlu0 %v2485
      %v2487 = vpop.xlane.xlu0 %2486
      %v2488 = vsel %vm2358, %v2446, 0.0
      %2489 = vadd.xlane.f32.xlu0 %v2488
      %v2490 = vpop.xlane.xlu0 %2489
      %v2491 = vsel %vm2358, %v2448, 0.0
      %2492 = vadd.xlane.f32.xlu0 %v2491
      %v2493 = vpop.xlane.xlu0 %2492
      %v2494 = vsel %vm2358, %v2450, 0.0
      %2495 = vadd.xlane.f32.xlu0 %v2494
      %v2496 = vpop.xlane.xlu0 %2495
      %v2497 = vsel %vm2358, %v2452, 0.0
      %2498 = vadd.xlane.f32.xlu0 %v2497
      %v2499 = vpop.xlane.xlu0 %2498
      %v2500 = vsel %vm2358, %v2454, 0.0
      %2501 = vadd.xlane.f32.xlu0 %v2500
      %v2502 = vpop.xlane.xlu0 %2501
      %v2503 = vlog2.pop %v2457
      %v2504 = vmul.f32 %v2503, 0.6931472
      %v2505 = vlog2.pop %v2460
      %v2506 = vmul.f32 %v2505, 0.6931472
      %v2507 = vlog2.pop %v2463
      %v2508 = vmul.f32 %v2507, 0.6931472
      %v2509 = vlog2.pop %v2466
      %v2510 = vmul.f32 %v2509, 0.6931472
      %v2511 = vlog2.pop %v2469
      %v2512 = vmul.f32 %v2511, 0.6931472
      %v2513 = vlog2.pop %v2472
      %v2514 = vmul.f32 %v2513, 0.6931472
      %v2515 = vlog2.pop %v2475
      %v2516 = vmul.f32 %v2515, 0.6931472
      %v2517 = vlog2.pop %v2478
      %v2518 = vmul.f32 %v2517, 0.6931472
      %v2519 = vlog2.pop %v2481
      %v2520 = vmul.f32 %v2519, 0.6931472
      %v2521 = vlog2.pop %v2484
      %v2522 = vmul.f32 %v2521, 0.6931472
      %v2523 = vlog2.pop %v2487
      %v2524 = vmul.f32 %v2523, 0.6931472
      %v2525 = vlog2.pop %v2490
      %v2526 = vmul.f32 %v2525, 0.6931472
      %v2527 = vlog2.pop %v2493
      %v2528 = vmul.f32 %v2527, 0.6931472
      %v2529 = vlog2.pop %v2496
      %v2530 = vmul.f32 %v2529, 0.6931472
      %v2531 = vlog2.pop %v2499
      %v2532 = vmul.f32 %v2531, 0.6931472
      %v2533 = vlog2.pop %v2502
      %v2534 = vmul.f32 %v2533, 0.6931472
      %v2535 = vsub.f32 %v2407, %v2504
      %v2536 = vsub.f32 %v2408, %v2506
      %v2537 = vsub.f32 %v2409, %v2508
      %v2538 = vsub.f32 %v2410, %v2510
      %v2539 = vsub.f32 %v2411, %v2512
      %v2540 = vsub.f32 %v2412, %v2514
      %v2541 = vsub.f32 %v2413, %v2516
      %v2542 = vsub.f32 %v2414, %v2518
      %v2543 = vsub.f32 %v2415, %v2520
      %v2544 = vsub.f32 %v2416, %v2522
      %v2545 = vsub.f32 %v2417, %v2524
      %v2546 = vsub.f32 %v2418, %v2526
      %v2547 = vsub.f32 %v2419, %v2528
      %v2548 = vsub.f32 %v2420, %v2530
      %v2549 = vsub.f32 %v2421, %v2532
      %v2550 = vsub.f32 %v2422, %v2534
      %2551 = vst.msk [vmem:[%s253] sm:$0xff] %vm2358, %v2535
      %2552 = vst.msk [vmem:[%s253 + $0x8] sm:$0xff] %vm2358, %v2536
      %2553 = vst.msk [vmem:[%s253 + $0x10] sm:$0xff] %vm2358, %v2537
      %2554 = vst.msk [vmem:[%s253 + $0x18] sm:$0xff] %vm2358, %v2538
      %2555 = vst.msk [vmem:[%s253 + $0x20] sm:$0xff] %vm2358, %v2539
      %2556 = vst.msk [vmem:[%s253 + $0x28] sm:$0xff] %vm2358, %v2540
      %2557 = vst.msk [vmem:[%s253 + $0x30] sm:$0xff] %vm2358, %v2541
      %2558 = vst.msk [vmem:[%s253 + $0x38] sm:$0xff] %vm2358, %v2542
      %2559 = vst.msk [vmem:[%s253 + $0x40] sm:$0xff] %vm2358, %v2543
      %2560 = vst.msk [vmem:[%s253 + $0x48] sm:$0xff] %vm2358, %v2544
      %2561 = vst.msk [vmem:[%s253 + $0x50] sm:$0xff] %vm2358, %v2545
      %2562 = vst.msk [vmem:[%s253 + $0x58] sm:$0xff] %vm2358, %v2546
      %2563 = vst.msk [vmem:[%s253 + $0x60] sm:$0xff] %vm2358, %v2547
      %2564 = vst.msk [vmem:[%s253 + $0x68] sm:$0xff] %vm2358, %v2548
      %2565 = vst.msk [vmem:[%s253 + $0x70] sm:$0xff] %vm2358, %v2549
      %2566 = vst.msk [vmem:[%s253 + $0x78] sm:$0xff] %vm2358, %v2550
      %s2567 = smul.u32 16, %s17
      %p2568 = scmp.lt.s32.totalorder %s2567, 31
      %s2569 = scalar_select %p2568, %s2567, 31
      %s2570 = smul.addr %s2569, 8
      %s2571 = scalar_lea.vmem %s6, %s2570
      // Predicated region
      $region45: #{tagger_forward.1} parent=43 // pred_check
        %p2572 = pneg %p166
      $region46: #{tagger_forward.1} parent=43 // pred_check_branch
        %2574 = sbr.rel (%p2572) target = $region48
      $region47: #{tagger_forward.1} parent=43 // pred_region
        %s2575 = smul.u32 16, %s17
      $region48: #{tagger_forward.1} parent=43 // pred_fallthru
        _
    $region44: #{tagger_forward.1} parent=5 // pred_fallthru
      _
    %p2576 = scmp.le.s32.totalorder 2, %s12
    // Predicated region
    $region49: #{tagger_forward.1} parent=5 // pred_check
      %p2577 = pneg %p2576
    $region50: #{tagger_forward.1} parent=5 // pred_check_branch
      %2579 = sbr.rel (%p2577) target = $region52
    $region51: #{tagger_forward.1} parent=5 // pred_region
      %s2580 = ssub.s32 %s12, 2
      // Predicated region
      $region53: #{tagger_forward.1} parent=51 // pred_check
        %p2581 = pneg %p172
      $region54: #{tagger_forward.1} parent=51 // pred_check_branch
        %2583 = sbr.rel (%p2581) target = $region56
      $region55: #{tagger_forward.1} parent=51 // pred_region
        %s2584 = smul.u32 16, %s18
        %p2585 = scmp.lt.s32.totalorder %s2584, 31
        %s2586 = scalar_select %p2585, %s2584, 31
        %s2587 = smul.addr %s2586, 8
        %s2588 = scalar_lea.vmem %s6, %s2587
      $region56: #{tagger_forward.1} parent=51 // pred_fallthru
        _
    $region52: #{tagger_forward.1} parent=5 // pred_fallthru
      _
  $region6: #{tagger_forward.1} parent=0 // loop_footer
    %s16 = sadd.s32 1, %s12
  $region7: #{tagger_forward.1} parent=0 // loop_footer_branch
    %11 = sbr.rel target = $region3
  $region8: #{tagger_forward.1} parent=0 // loop_exit
    _

</llo_original>
